<compile_context>
chip_gen: v5e
topology: v5e:2x2
jax: 0.10.0
libtpu: 0.0.40
codegen_flags: <defaults>
</compile_context>

<pallas_src>
import jax
import jax.numpy as jnp
from jax.experimental import pallas as pl
from jax.experimental.pallas import tpu as pltpu


# ----------------------------------------------------------------------------
# Kernel: one grid step == (batch element n, row block rb) -> HB output rows.
# ----------------------------------------------------------------------------
def _bottleneck_kernel(xm_ref, xp_ref, xn_ref, w1_ref, b1_ref, w2_ref, b2_ref,
                       w3_ref, b3_ref, y_ref):
    # xm_ref : (1, HB, W, Cp)   bf16  main rows of this block (also the residual)
    # xp_ref : (1, 1,  W, Cp)   bf16  halo row above (clamped at the image top)
    # xn_ref : (1, 1,  W, Cp)   bf16  halo row below (clamped at the image bottom)
    # w1_ref : (Cp, Pp)         bf16  conv1 1x1 weight, BN1 scale folded in
    # b1_ref : (1, Pp)          f32   BN1 folded bias
    # w2_ref : (3, 3*Pp, Pp)    bf16  conv2 3x3 weight, grouped per kernel row
    # b2_ref : (1, Pp)          f32   BN2 folded bias
    # w3_ref : (Pp, Cp)         bf16  conv3 1x1 weight, BN3 scale folded in
    # b3_ref : (1, Cp)          f32   BN3 folded bias
    # y_ref  : (1, HB*W, Cp)    bf16  lane-dense output slab
    _, HB, W, Cp = xm_ref.shape
    Pp = w1_ref.shape[1]
    S = (HB + 2) * W

    rb = pl.program_id(1)
    nrb = pl.num_programs(1)

    # Activation slab with a one-row halo on each side.
    xs = jnp.concatenate([xp_ref[0], xm_ref[0], xn_ref[0]], axis=0)  # (HB+2, W, Cp)

    # ---- conv1 (1x1) + BN1 + ReLU : channel matmul, f32 accumulate ----------
    h1 = jnp.dot(xs.reshape(S, Cp), w1_ref[...],
                 preferred_element_type=jnp.float32)                 # (S, Pp)
    h1 = jnp.maximum(h1 + b1_ref[...], 0.0).reshape(HB + 2, W, Pp)

    # Zero halo rows that fall outside the image (conv2's zero padding).
    top = jnp.where(rb == 0, 0.0, 1.0)
    bot = jnp.where(rb == nrb - 1, 0.0, 1.0)
    h1 = jnp.concatenate(
        [h1[0:1] * top, h1[1:HB + 1], h1[HB + 1:HB + 2] * bot], axis=0)
    h1 = h1.astype(jnp.bfloat16)

    # ---- conv2 (3x3, stride 1, pad 1) + BN2 + ReLU --------------------------
    # Column-triple operand: lane blocks [w-1 | w | w+1], each Pp channels wide.
    zcol = jnp.zeros((HB + 2, 1, Pp), jnp.bfloat16)
    t = jnp.concatenate(
        [jnp.concatenate([zcol, h1[:, :W - 1, :]], axis=1),   # left neighbour
         h1,                                                  # centre
         jnp.concatenate([h1[:, 1:, :], zcol], axis=1)],      # right neighbour
        axis=2)                                               # (HB+2, W, 3*Pp)

    # 3 deep-K matmuls (K = 3*Pp), one per kernel row, accumulated in f32.
    acc = jnp.zeros((HB * W, Pp), jnp.float32)
    for dh in range(3):
        op = t[dh:dh + HB].reshape(HB * W, 3 * Pp)
        acc = acc + jnp.dot(op, w2_ref[dh], preferred_element_type=jnp.float32)
    h2 = jnp.maximum(acc + b2_ref[...], 0.0).astype(jnp.bfloat16)    # (HB*W, Pp)

    # ---- conv3 (1x1) + BN3, residual add (identity), ReLU -------------------
    h3 = jnp.dot(h2, w3_ref[...], preferred_element_type=jnp.float32) + b3_ref[...]
    res = xm_ref[0].reshape(HB * W, Cp).astype(jnp.float32)
    out = jnp.maximum(h3 + res, 0.0)
    y_ref[0] = out.astype(y_ref.dtype)


# ----------------------------------------------------------------------------
# Wrapper: NCHW in, NCHW out.  Folds BN, pads channels, tiles rows.
# ----------------------------------------------------------------------------
def _round_up(v, m):
    return (v + m - 1) // m * m


def _pick_row_block(H, W, target=512):
    """Largest divisor of H with HB*W <= target spatial positions (8/16-aligned)."""
    if H * W <= 2 * target:
        return H
    best = H
    for d in range(1, H):
        if H % d == 0 and (d * W) % 16 == 0 and d * W <= target:
            best = d
    return best


def bottleneck_pallas(x_nchw, params, row_block=None):
    # TODO(synk): only stride=1 / downsample=None is implemented (the only
    # configuration consistent with the identity residual of the reference).
    eps = 1e-5
    x = jnp.transpose(x_nchw, (0, 2, 3, 1))                   # NCHW -> NHWC
    N, H, W, Cin = x.shape

    def fold(conv_w_oihw, gamma, beta, mean, var):
        scale = gamma / jnp.sqrt(var + eps)                   # (Cout,)
        bias = beta - mean * scale
        return conv_w_oihw * scale[:, None, None, None], bias

    w1f, b1 = fold(params["w1"], params["g1"], params["be1"], params["m1"], params["v1"])
    w2f, b2 = fold(params["w2"], params["g2"], params["be2"], params["m2"], params["v2"])
    w3f, b3 = fold(params["w3"], params["g3"], params["be3"], params["m3"], params["v3"])

    P = w1f.shape[0]
    Cout = w3f.shape[0]
    assert Cin == Cout == 4 * P, "identity residual needs inplanes == 4*planes"

    LANE = 128
    Pp = _round_up(P, LANE)                                   # lane-dense hidden width
    Cp = _round_up(Cin, LANE)                                 # lane-dense in/out width

    if row_block is None:
        row_block = _pick_row_block(H, W)
    HB = row_block
    assert H % HB == 0, "row_block must divide H"
    assert HB == H or (HB * W) % 8 == 0, "row_block*W must be a multiple of 8"
    RB = H // HB

    cdt = jnp.bfloat16

    # bf16 input, channels zero-padded to a multiple of 128.
    xk = jnp.pad(x, ((0, 0), (0, 0), (0, 0), (0, Cp - Cin))).astype(cdt)

    # Kernel weight layouts (BN scale folded), zero-padded, bf16.
    w1_k = jnp.pad(jnp.transpose(w1f[:, :, 0, 0], (1, 0)),
                   ((0, Cp - Cin), (0, Pp - P))).astype(cdt)            # (Cp, Pp)
    w2_k = jnp.pad(jnp.transpose(w2f, (2, 3, 1, 0)),                    # (kh, kw, ci, co)
                   ((0, 0), (0, 0), (0, Pp - P), (0, Pp - P)))
    w2_k = w2_k.reshape(3, 3 * Pp, Pp).astype(cdt)                      # (3, 3*Pp, Pp)
    w3_k = jnp.pad(jnp.transpose(w3f[:, :, 0, 0], (1, 0)),
                   ((0, Pp - P), (0, Cp - Cout))).astype(cdt)           # (Pp, Cp)
    b1_k = jnp.pad(b1, (0, Pp - P)).reshape(1, Pp).astype(jnp.float32)
    b2_k = jnp.pad(b2, (0, Pp - P)).reshape(1, Pp).astype(jnp.float32)
    b3_k = jnp.pad(b3, (0, Cp - Cout)).reshape(1, Cp).astype(jnp.float32)

    y_flat = pl.pallas_call(
        _bottleneck_kernel,
        out_shape=jax.ShapeDtypeStruct((N, H * W, Cp), cdt),
        grid_spec=pltpu.PrefetchScalarGridSpec(
            num_scalar_prefetch=0,
            grid=(N, RB),
            in_specs=[
                # main rows of the block
                pl.BlockSpec((1, HB, W, Cp), lambda n, r: (n, r, 0, 0)),
                # one halo row above (clamped; masked in-kernel at the image top)
                pl.BlockSpec((1, 1, W, Cp),
                             lambda n, r: (n, jnp.maximum(r * HB - 1, 0), 0, 0)),
                # one halo row below (clamped; masked at the image bottom)
                pl.BlockSpec((1, 1, W, Cp),
                             lambda n, r: (n, jnp.minimum(r * HB + HB, H - 1), 0, 0)),
                pl.BlockSpec((Cp, Pp), lambda n, r: (0, 0)),
                pl.BlockSpec((1, Pp), lambda n, r: (0, 0)),
                pl.BlockSpec((3, 3 * Pp, Pp), lambda n, r: (0, 0, 0)),
                pl.BlockSpec((1, Pp), lambda n, r: (0, 0)),
                pl.BlockSpec((Pp, Cp), lambda n, r: (0, 0)),
                pl.BlockSpec((1, Cp), lambda n, r: (0, 0)),
            ],
            out_specs=pl.BlockSpec((1, HB * W, Cp), lambda n, r: (n, r, 0)),
        ),
        compiler_params=pltpu.CompilerParams(
            dimension_semantics=("parallel", "parallel"),
            vmem_limit_bytes=32 * 1024 * 1024,
        ),
    )(xk, xk, xk, w1_k, b1_k, w2_k, b2_k, w3_k, b3_k)

    y = y_flat.reshape(N, H, W, Cp)[..., :Cout].astype(jnp.float32)
    return jnp.transpose(y, (0, 3, 1, 2))                     # NHWC -> NCHW


# ----------------------------------------------------------------------------
# Pure-JAX reference mirroring the PyTorch forward (eval-mode BN, f32).
# ----------------------------------------------------------------------------
def bottleneck_ref(x_nchw, params):
    eps = 1e-5

    def conv(x, w, pad=0):
        return jax.lax.conv_general_dilated(
            x, w, window_strides=(1, 1), padding=[(pad, pad), (pad, pad)],
            dimension_numbers=("NCHW", "OIHW", "NCHW"))

    def bn(x, g, b, m, v):
        g, b, m, v = (a[None, :, None, None] for a in (g, b, m, v))
        return (x - m) / jnp.sqrt(v + eps) * g + b

    out = jax.nn.relu(bn(conv(x_nchw, params["w1"]),
                         params["g1"], params["be1"], params["m1"], params["v1"]))
    out = jax.nn.relu(bn(conv(out, params["w2"], pad=1),
                         params["g2"], params["be2"], params["m2"], params["v2"]))
    out = bn(conv(out, params["w3"]),
             params["g3"], params["be3"], params["m3"], params["v3"])
    return jax.nn.relu(out + x_nchw)


# ----------------------------------------------------------------------------
def make_params(key, inplanes, planes):
    expansion = 4
    ks = list(jax.random.split(key, 16))

    def nrm(k, shape, s=0.1):
        return s * jax.random.normal(k, shape, jnp.float32)

    def pos(k, shape):
        return 0.5 + jax.random.uniform(k, shape, jnp.float32)

    return {
        "w1": nrm(ks[0], (planes, inplanes, 1, 1)),
        "g1": pos(ks[1], (planes,)), "be1": nrm(ks[2], (planes,)),
        "m1": nrm(ks[3], (planes,)), "v1": pos(ks[4], (planes,)),
        "w2": nrm(ks[5], (planes, planes, 3, 3)),
        "g2": pos(ks[6], (planes,)), "be2": nrm(ks[7], (planes,)),
        "m2": nrm(ks[8], (planes,)), "v2": pos(ks[9], (planes,)),
        "w3": nrm(ks[10], (planes * expansion, planes, 1, 1)),
        "g3": pos(ks[11], (planes * expansion,)), "be3": nrm(ks[12], (planes * expansion,)),
        "m3": nrm(ks[13], (planes * expansion,)), "v3": pos(ks[14], (planes * expansion,)),
    }


if __name__ == "__main__":
    key = jax.random.PRNGKey(0)
    k_x, k_p = jax.random.split(key)

    # Small shapes: batch=2, planes=8 -> inplanes = 4*planes = 32, spatial=8.
    N, planes, H, W = 2, 8, 8, 8
    inplanes = 4 * planes
    x = jax.random.normal(k_x, (N, inplanes, H, W), jnp.float32)   # NCHW
    params = make_params(k_p, inplanes, planes)

    y_ref = jax.block_until_ready(bottleneck_ref(x, params))

    # 1) whole plane per grid step (RB = 1)
    y1 = jax.block_until_ready(bottleneck_pallas(x, params))
    # 2) two row blocks of 4 rows -> exercises halo BlockSpecs + boundary masking
    y2 = jax.block_until_ready(bottleneck_pallas(x, params, row_block=4))

    for y in (y1, y2):
        assert y.shape == y_ref.shape == (N, inplanes, H, W)
        err = float(jnp.max(jnp.abs(y - y_ref)))
        # bf16 matmul operands / activations (f32 accumulation) -> looser tol.
        assert err < 8e-2, err

    print("KERNEL_OK")
</pallas_src>

<mosaic_0001>
module attributes {stable_mosaic.version = 11 : i64} {
  func.func @_bottleneck_kernel(%arg0: i32, %arg1: i32, %arg2: memref<1x8x8x128xbf16, #tpu.memory_space<vmem>>, %arg3: memref<1x1x8x128xbf16, #tpu.memory_space<vmem>>, %arg4: memref<1x1x8x128xbf16, #tpu.memory_space<vmem>>, %arg5: memref<128x128xbf16, #tpu.memory_space<vmem>>, %arg6: memref<1x128xf32, #tpu.memory_space<vmem>>, %arg7: memref<3x384x128xbf16, #tpu.memory_space<vmem>>, %arg8: memref<1x128xf32, #tpu.memory_space<vmem>>, %arg9: memref<128x128xbf16, #tpu.memory_space<vmem>>, %arg10: memref<1x128xf32, #tpu.memory_space<vmem>>, %arg11: memref<1x64x128xbf16, #tpu.memory_space<vmem>>) attributes {dimension_semantics = [#tpu.dimension_semantics<parallel>, #tpu.dimension_semantics<parallel>], iteration_bounds = array<i64: 2, 1>, scalar_prefetch = 0 : i64, scratch_operands = 0 : i64, tpu.core_type = #tpu.core_type<tc>, window_params = [{transform_indices = @transform_0, window_bounds = array<i64: 1, 8, 8, 128>}, {transform_indices = @transform_1, window_bounds = array<i64: 1, 1, 8, 128>}, {transform_indices = @transform_2, window_bounds = array<i64: 1, 1, 8, 128>}, {pipeline_mode = #tpu.pipeline_mode<synchronous>, transform_indices = @transform_3, window_bounds = array<i64: 128, 128>}, {pipeline_mode = #tpu.pipeline_mode<synchronous>, transform_indices = @transform_4, window_bounds = array<i64: 1, 128>}, {pipeline_mode = #tpu.pipeline_mode<synchronous>, transform_indices = @transform_5, window_bounds = array<i64: 3, 384, 128>}, {pipeline_mode = #tpu.pipeline_mode<synchronous>, transform_indices = @transform_6, window_bounds = array<i64: 1, 128>}, {pipeline_mode = #tpu.pipeline_mode<synchronous>, transform_indices = @transform_7, window_bounds = array<i64: 128, 128>}, {pipeline_mode = #tpu.pipeline_mode<synchronous>, transform_indices = @transform_8, window_bounds = array<i64: 1, 128>}, {transform_indices = @transform_9, window_bounds = array<i64: 1, 64, 128>}]} {
    %c0 = arith.constant 0 : index
    %c0_0 = arith.constant 0 : index
    %c0_1 = arith.constant 0 : index
    %c0_2 = arith.constant 0 : index
    %0 = vector.load %arg3[%c0, %c0_0, %c0_1, %c0_2] : memref<1x1x8x128xbf16, #tpu.memory_space<vmem>>, vector<1x1x8x128xbf16>
    %1 = vector.shape_cast %0 : vector<1x1x8x128xbf16> to vector<1x8x128xbf16>
    %c0_3 = arith.constant 0 : index
    %c0_4 = arith.constant 0 : index
    %c0_5 = arith.constant 0 : index
    %c0_6 = arith.constant 0 : index
    %2 = vector.load %arg2[%c0_3, %c0_4, %c0_5, %c0_6] : memref<1x8x8x128xbf16, #tpu.memory_space<vmem>>, vector<1x8x8x128xbf16>
    %3 = vector.shape_cast %2 : vector<1x8x8x128xbf16> to vector<8x8x128xbf16>
    %c0_7 = arith.constant 0 : index
    %c0_8 = arith.constant 0 : index
    %c0_9 = arith.constant 0 : index
    %c0_10 = arith.constant 0 : index
    %4 = vector.load %arg4[%c0_7, %c0_8, %c0_9, %c0_10] : memref<1x1x8x128xbf16, #tpu.memory_space<vmem>>, vector<1x1x8x128xbf16>
    %5 = vector.shape_cast %4 : vector<1x1x8x128xbf16> to vector<1x8x128xbf16>
    %6 = tpu.concatenate %1, %3, %5 in 0 : vector<1x8x128xbf16>, vector<8x8x128xbf16>, vector<1x8x128xbf16> -> vector<10x8x128xbf16>
    %7 = vector.shape_cast %6 : vector<10x8x128xbf16> to vector<80x128xbf16>
    %c0_11 = arith.constant 0 : index
    %c0_12 = arith.constant 0 : index
    %8 = vector.load %arg5[%c0_11, %c0_12] : memref<128x128xbf16, #tpu.memory_space<vmem>>, vector<128x128xbf16>
    %cst = arith.constant dense<0.000000e+00> : vector<80x128xf32>
    %9 = tpu.matmul %7, %8, %cst {dimension_numbers = #tpu.dot_dimension_numbers<[1], [0], [0], [1], [0, 0, 1, 1], [], []>} : vector<80x128xbf16>, vector<128x128xbf16>, vector<80x128xf32> -> vector<80x128xf32>
    %c0_13 = arith.constant 0 : index
    %c0_14 = arith.constant 0 : index
    %10 = vector.load %arg6[%c0_13, %c0_14] : memref<1x128xf32, #tpu.memory_space<vmem>>, vector<1x128xf32>
    %11 = vector.broadcast %10 : vector<1x128xf32> to vector<80x128xf32>
    %12 = arith.addf %9, %11 : vector<80x128xf32>
    %cst_15 = arith.constant 0.000000e+00 : f32
    %13 = vector.broadcast %cst_15 : f32 to vector<80x128xf32>
    %14 = arith.maximumf %12, %13 : vector<80x128xf32>
    %15 = vector.shape_cast %14 : vector<80x128xf32> to vector<10x8x128xf32>
    %c0_i32 = arith.constant 0 : i32
    %16 = arith.cmpi eq, %arg1, %c0_i32 : i32
    %cst_16 = arith.constant 0.000000e+00 : f32
    %cst_17 = arith.constant 1.000000e+00 : f32
    %17 = arith.select %16, %cst_16, %cst_17 : f32
    %c0_i32_18 = arith.constant 0 : i32
    %18 = arith.cmpi eq, %arg1, %c0_i32_18 : i32
    %cst_19 = arith.constant 0.000000e+00 : f32
    %cst_20 = arith.constant 1.000000e+00 : f32
    %19 = arith.select %18, %cst_19, %cst_20 : f32
    %20 = vector.extract_strided_slice %15 {offsets = [0, 0, 0], sizes = [1, 8, 128], strides = [1, 1, 1]} : vector<10x8x128xf32> to vector<1x8x128xf32>
    %21 = vector.broadcast %17 : f32 to vector<1x8x128xf32>
    %22 = arith.mulf %20, %21 : vector<1x8x128xf32>
    %23 = vector.extract_strided_slice %15 {offsets = [1, 0, 0], sizes = [8, 8, 128], strides = [1, 1, 1]} : vector<10x8x128xf32> to vector<8x8x128xf32>
    %24 = vector.extract_strided_slice %15 {offsets = [9, 0, 0], sizes = [1, 8, 128], strides = [1, 1, 1]} : vector<10x8x128xf32> to vector<1x8x128xf32>
    %25 = vector.broadcast %19 : f32 to vector<1x8x128xf32>
    %26 = arith.mulf %24, %25 : vector<1x8x128xf32>
    %27 = tpu.concatenate %22, %23, %26 in 0 : vector<1x8x128xf32>, vector<8x8x128xf32>, vector<1x8x128xf32> -> vector<10x8x128xf32>
    %28 = arith.truncf %27 : vector<10x8x128xf32> to vector<10x8x128xbf16>
    %cst_21 = arith.constant 0.000000e+00 : bf16
    %29 = vector.broadcast %cst_21 : bf16 to vector<10x1x128xbf16>
    %30 = vector.extract_strided_slice %28 {offsets = [0, 0, 0], sizes = [10, 7, 128], strides = [1, 1, 1]} : vector<10x8x128xbf16> to vector<10x7x128xbf16>
    %31 = tpu.concatenate %29, %30 in 1 : vector<10x1x128xbf16>, vector<10x7x128xbf16> -> vector<10x8x128xbf16>
    %32 = vector.extract_strided_slice %28 {offsets = [0, 1, 0], sizes = [10, 7, 128], strides = [1, 1, 1]} : vector<10x8x128xbf16> to vector<10x7x128xbf16>
    %33 = tpu.concatenate %32, %29 in 1 : vector<10x7x128xbf16>, vector<10x1x128xbf16> -> vector<10x8x128xbf16>
    %34 = tpu.concatenate %31, %28, %33 in 2 : vector<10x8x128xbf16>, vector<10x8x128xbf16>, vector<10x8x128xbf16> -> vector<10x8x384xbf16>
    %cst_22 = arith.constant 0.000000e+00 : f32
    %35 = vector.broadcast %cst_22 : f32 to vector<64x128xf32>
    %36 = vector.extract_strided_slice %34 {offsets = [0, 0, 0], sizes = [8, 8, 384], strides = [1, 1, 1]} : vector<10x8x384xbf16> to vector<8x8x384xbf16>
    %37 = vector.shape_cast %36 : vector<8x8x384xbf16> to vector<64x384xbf16>
    %c0_23 = arith.constant 0 : index
    %c0_24 = arith.constant 0 : index
    %c0_25 = arith.constant 0 : index
    %38 = vector.load %arg7[%c0_23, %c0_24, %c0_25] : memref<3x384x128xbf16, #tpu.memory_space<vmem>>, vector<1x384x128xbf16>
    %39 = vector.shape_cast %38 : vector<1x384x128xbf16> to vector<384x128xbf16>
    %cst_26 = arith.constant dense<0.000000e+00> : vector<64x128xf32>
    %40 = tpu.matmul %37, %39, %cst_26 {dimension_numbers = #tpu.dot_dimension_numbers<[1], [0], [0], [1], [0, 0, 1, 1], [], []>} : vector<64x384xbf16>, vector<384x128xbf16>, vector<64x128xf32> -> vector<64x128xf32>
    %41 = arith.addf %35, %40 : vector<64x128xf32>
    %42 = vector.extract_strided_slice %34 {offsets = [1, 0, 0], sizes = [8, 8, 384], strides = [1, 1, 1]} : vector<10x8x384xbf16> to vector<8x8x384xbf16>
    %43 = vector.shape_cast %42 : vector<8x8x384xbf16> to vector<64x384xbf16>
    %c1 = arith.constant 1 : index
    %c0_27 = arith.constant 0 : index
    %c0_28 = arith.constant 0 : index
    %44 = vector.load %arg7[%c1, %c0_27, %c0_28] : memref<3x384x128xbf16, #tpu.memory_space<vmem>>, vector<1x384x128xbf16>
    %45 = vector.shape_cast %44 : vector<1x384x128xbf16> to vector<384x128xbf16>
    %cst_29 = arith.constant dense<0.000000e+00> : vector<64x128xf32>
    %46 = tpu.matmul %43, %45, %cst_29 {dimension_numbers = #tpu.dot_dimension_numbers<[1], [0], [0], [1], [0, 0, 1, 1], [], []>} : vector<64x384xbf16>, vector<384x128xbf16>, vector<64x128xf32> -> vector<64x128xf32>
    %47 = arith.addf %41, %46 : vector<64x128xf32>
    %48 = vector.extract_strided_slice %34 {offsets = [2, 0, 0], sizes = [8, 8, 384], strides = [1, 1, 1]} : vector<10x8x384xbf16> to vector<8x8x384xbf16>
    %49 = vector.shape_cast %48 : vector<8x8x384xbf16> to vector<64x384xbf16>
    %c2 = arith.constant 2 : index
    %c0_30 = arith.constant 0 : index
    %c0_31 = arith.constant 0 : index
    %50 = vector.load %arg7[%c2, %c0_30, %c0_31] : memref<3x384x128xbf16, #tpu.memory_space<vmem>>, vector<1x384x128xbf16>
    %51 = vector.shape_cast %50 : vector<1x384x128xbf16> to vector<384x128xbf16>
    %cst_32 = arith.constant dense<0.000000e+00> : vector<64x128xf32>
    %52 = tpu.matmul %49, %51, %cst_32 {dimension_numbers = #tpu.dot_dimension_numbers<[1], [0], [0], [1], [0, 0, 1, 1], [], []>} : vector<64x384xbf16>, vector<384x128xbf16>, vector<64x128xf32> -> vector<64x128xf32>
    %53 = arith.addf %47, %52 : vector<64x128xf32>
    %c0_33 = arith.constant 0 : index
    %c0_34 = arith.constant 0 : index
    %54 = vector.load %arg8[%c0_33, %c0_34] : memref<1x128xf32, #tpu.memory_space<vmem>>, vector<1x128xf32>
    %55 = vector.broadcast %54 : vector<1x128xf32> to vector<64x128xf32>
    %56 = arith.addf %53, %55 : vector<64x128xf32>
    %cst_35 = arith.constant 0.000000e+00 : f32
    %57 = vector.broadcast %cst_35 : f32 to vector<64x128xf32>
    %58 = arith.maximumf %56, %57 : vector<64x128xf32>
    %59 = arith.truncf %58 : vector<64x128xf32> to vector<64x128xbf16>
    %c0_36 = arith.constant 0 : index
    %c0_37 = arith.constant 0 : index
    %60 = vector.load %arg9[%c0_36, %c0_37] : memref<128x128xbf16, #tpu.memory_space<vmem>>, vector<128x128xbf16>
    %cst_38 = arith.constant dense<0.000000e+00> : vector<64x128xf32>
    %61 = tpu.matmul %59, %60, %cst_38 {dimension_numbers = #tpu.dot_dimension_numbers<[1], [0], [0], [1], [0, 0, 1, 1], [], []>} : vector<64x128xbf16>, vector<128x128xbf16>, vector<64x128xf32> -> vector<64x128xf32>
    %c0_39 = arith.constant 0 : index
    %c0_40 = arith.constant 0 : index
    %62 = vector.load %arg10[%c0_39, %c0_40] : memref<1x128xf32, #tpu.memory_space<vmem>>, vector<1x128xf32>
    %63 = vector.broadcast %62 : vector<1x128xf32> to vector<64x128xf32>
    %64 = arith.addf %61, %63 : vector<64x128xf32>
    %c0_41 = arith.constant 0 : index
    %c0_42 = arith.constant 0 : index
    %c0_43 = arith.constant 0 : index
    %c0_44 = arith.constant 0 : index
    %65 = vector.load %arg2[%c0_41, %c0_42, %c0_43, %c0_44] : memref<1x8x8x128xbf16, #tpu.memory_space<vmem>>, vector<1x8x8x128xbf16>
    %66 = vector.shape_cast %65 : vector<1x8x8x128xbf16> to vector<8x8x128xbf16>
    %67 = vector.shape_cast %66 : vector<8x8x128xbf16> to vector<64x128xbf16>
    %68 = arith.extf %67 : vector<64x128xbf16> to vector<64x128xf32>
    %69 = arith.addf %64, %68 : vector<64x128xf32>
    %cst_45 = arith.constant 0.000000e+00 : f32
    %70 = vector.broadcast %cst_45 : f32 to vector<64x128xf32>
    %71 = arith.maximumf %69, %70 : vector<64x128xf32>
    %72 = arith.truncf %71 : vector<64x128xf32> to vector<64x128xbf16>
    %c0_46 = arith.constant 0 : index
    %c0_47 = arith.constant 0 : index
    %c0_48 = arith.constant 0 : index
    %73 = vector.load %arg11[%c0_46, %c0_47, %c0_48] : memref<1x64x128xbf16, #tpu.memory_space<vmem>>, vector<1x64x128xbf16>
    %74 = vector.shape_cast %73 : vector<1x64x128xbf16> to vector<64x128xbf16>
    %75 = vector.shape_cast %72 : vector<64x128xbf16> to vector<1x64x128xbf16>
    tpu.vector_store %arg11[%c0_46, %c0_47, %c0_48], %75 {strides = array<i32>} : memref<1x64x128xbf16, #tpu.memory_space<vmem>>, vector<1x64x128xbf16>,
    return
  }
  func.func @transform_0(%arg0: i32, %arg1: i32) -> (i32, i32, i32, i32) {
    %c0_i32 = arith.constant 0 : i32
    %c0_i32_0 = arith.constant 0 : i32
    %c0_i32_1 = arith.constant 0 : i32
    return %arg0, %arg1, %c0_i32, %c0_i32_0 : i32, i32, i32, i32
  }
  func.func @transform_1(%arg0: i32, %arg1: i32) -> (i32, i32, i32, i32) {
    %c8_i32 = arith.constant 8 : i32
    %0 = arith.muli %arg1, %c8_i32 : i32
    %c1_i32 = arith.constant 1 : i32
    %1 = arith.subi %0, %c1_i32 : i32
    %c0_i32 = arith.constant 0 : i32
    %2 = arith.maxsi %1, %c0_i32 : i32
    %c0_i32_0 = arith.constant 0 : i32
    %c0_i32_1 = arith.constant 0 : i32
    %c0_i32_2 = arith.constant 0 : i32
    return %arg0, %2, %c0_i32_0, %c0_i32_1 : i32, i32, i32, i32
  }
  func.func @transform_2(%arg0: i32, %arg1: i32) -> (i32, i32, i32, i32) {
    %c8_i32 = arith.constant 8 : i32
    %0 = arith.muli %arg1, %c8_i32 : i32
    %c8_i32_0 = arith.constant 8 : i32
    %1 = arith.addi %0, %c8_i32_0 : i32
    %c7_i32 = arith.constant 7 : i32
    %2 = arith.minsi %1, %c7_i32 : i32
    %c0_i32 = arith.constant 0 : i32
    %c0_i32_1 = arith.constant 0 : i32
    %c0_i32_2 = arith.constant 0 : i32
    return %arg0, %2, %c0_i32, %c0_i32_1 : i32, i32, i32, i32
  }
  func.func @transform_3(%arg0: i32, %arg1: i32) -> (i32, i32) {
    %c0_i32 = arith.constant 0 : i32
    %c0_i32_0 = arith.constant 0 : i32
    %c0_i32_1 = arith.constant 0 : i32
    return %c0_i32, %c0_i32_0 : i32, i32
  }
  func.func @transform_4(%arg0: i32, %arg1: i32) -> (i32, i32) {
    %c0_i32 = arith.constant 0 : i32
    %c0_i32_0 = arith.constant 0 : i32
    %c0_i32_1 = arith.constant 0 : i32
    return %c0_i32, %c0_i32_0 : i32, i32
  }
  func.func @transform_5(%arg0: i32, %arg1: i32) -> (i32, i32, i32) {
    %c0_i32 = arith.constant 0 : i32
    %c0_i32_0 = arith.constant 0 : i32
    %c0_i32_1 = arith.constant 0 : i32
    %c0_i32_2 = arith.constant 0 : i32
    return %c0_i32, %c0_i32_0, %c0_i32_1 : i32, i32, i32
  }
  func.func @transform_6(%arg0: i32, %arg1: i32) -> (i32, i32) {
    %c0_i32 = arith.constant 0 : i32
    %c0_i32_0 = arith.constant 0 : i32
    %c0_i32_1 = arith.constant 0 : i32
    return %c0_i32, %c0_i32_0 : i32, i32
  }
  func.func @transform_7(%arg0: i32, %arg1: i32) -> (i32, i32) {
    %c0_i32 = arith.constant 0 : i32
    %c0_i32_0 = arith.constant 0 : i32
    %c0_i32_1 = arith.constant 0 : i32
    return %c0_i32, %c0_i32_0 : i32, i32
  }
  func.func @transform_8(%arg0: i32, %arg1: i32) -> (i32, i32) {
    %c0_i32 = arith.constant 0 : i32
    %c0_i32_0 = arith.constant 0 : i32
    %c0_i32_1 = arith.constant 0 : i32
    return %c0_i32, %c0_i32_0 : i32, i32
  }
  func.func @transform_9(%arg0: i32, %arg1: i32) -> (i32, i32, i32) {
    %c0_i32 = arith.constant 0 : i32
    %c0_i32_0 = arith.constant 0 : i32
    return %arg0, %arg1, %c0_i32 : i32, i32, i32
  }
}

</mosaic_0001>

<llo_original>
// kernel: tpu_custom_call.1
$region0: #{tpu_custom_call.1}
  #allocation0 [shape = 'u32[]', space=smem, size = 0x4, offset = 0x4, fixed_abs, tag = 'smem constant byte address 0x4 - core index']
  #allocation1 [shape = 'u32[72,128]{1,0:T(1,128)}', space=vmem, size = 0x9000, scoped, tag = 'internal scratch']
  %s0 = inlined_call_operand.hbm [shape: bf16[2,8,8,128], index: 0, kind: input, shape index: {}]
  %s1 = inlined_call_operand.hbm [shape: bf16[2,8,8,128], index: 1, kind: input, shape index: {}]
  %s2 = inlined_call_operand.hbm [shape: bf16[2,8,8,128], index: 2, kind: input, shape index: {}]
  %s3 = inlined_call_operand.hbm [shape: bf16[128,128], index: 3, kind: input, shape index: {}]
  %s4 = inlined_call_operand.vmem [shape: f32[1,128], index: 4, kind: input, shape index: {}]
  %s5 = inlined_call_operand.hbm [shape: bf16[3,384,128], index: 5, kind: input, shape index: {}]
  %s6 = inlined_call_operand.vmem [shape: f32[1,128], index: 6, kind: input, shape index: {}]
  %s7 = inlined_call_operand.hbm [shape: bf16[128,128], index: 7, kind: input, shape index: {}]
  %s8 = inlined_call_operand.vmem [shape: f32[1,128], index: 8, kind: input, shape index: {}]
  %s9 = inlined_call_operand.hbm [shape: bf16[2,64,128], index: 9, kind: output, shape index: {}]
  %s10 = sld [smem:[#allocation0]]
  $region93: #{tpu_custom_call.1} parent=0
    _
  %s12 = ssub.s32 1, %s10
  %s13 = scalar_select 0, %s12, %s10
  $region1: #{tpu_custom_call.1} parent=0
    #allocation2 [shape = 'u8[32768]{0}', space=vmem, size = 0x8000, scoped, tag = 'input window, operand 0']
    #allocation3 [shape = 's32[2]{0}', space=sflag, size = 0x8, scoped, tag = 'scoped memory for tpu_custom_call.1']
    #allocation4 [shape = 's32[2]{0}', space=sflag, size = 0x8, scoped, tag = 'scoped memory for tpu_custom_call.1']
    #allocation5 [shape = 'u8[4096]{0}', space=vmem, size = 0x1000, scoped, tag = 'input window, operand 1']
    #allocation6 [shape = 's32[2]{0}', space=sflag, size = 0x8, scoped, tag = 'scoped memory for tpu_custom_call.1']
    #allocation7 [shape = 'u8[4096]{0}', space=vmem, size = 0x1000, scoped, tag = 'input window, operand 2']
    #allocation8 [shape = 'u8[32768]{0}', space=vmem, size = 0x8000, scoped, tag = 'input window, operand 3, single buffered']
    #allocation9 [shape = 's32[1]{0}', space=sflag, size = 0x4, scoped, tag = 'scoped memory for tpu_custom_call.1']
    #allocation10 [shape = 'u8[294912]{0}', space=vmem, size = 0x48000, scoped, tag = 'input window, operand 5, single buffered']
    #allocation11 [shape = 'u8[32768]{0}', space=vmem, size = 0x8000, scoped, tag = 'input window, operand 7, single buffered']
    #allocation12 [shape = 's32[1]{0}', space=sflag, size = 0x4, scoped, tag = 'scoped memory for tpu_custom_call.1']
    #allocation13 [shape = 'u8[32768]{0}', space=vmem, size = 0x8000, scoped, tag = 'output window, operand 0']
    %14 = vsyncpa [#allocation3], 0
    %s15 = scalar_lea.sflag [#allocation3], 1
    %16 = vsyncpa %s15, 0
    %17 = vsyncpa [#allocation6], 0
    %s18 = scalar_lea.sflag [#allocation6], 1
    %19 = vsyncpa %s18, 0
    %20 = vsyncpa [#allocation9], 0
    %21 = vsyncpa [#allocation12], 0
    %22 = vsyncpa [#allocation4], 0
    %s23 = scalar_lea.sflag [#allocation4], 1
    %24 = vsyncpa %s23, 0
    loop: start=0, step=1, limit=4
    $region2: #{tpu_custom_call.1} parent=1 // loop_pre_header
      _
    $region3: #{tpu_custom_call.1} parent=1 // loop_header
      %s26 = sphi 0, %s30
      %p27 = scmp.ge.s32.totalorder %s26, 4
      %s33 = sphi 0, %s45
      %s34 = sphi 0, %s41
      %s35 = sphi 0, %s33
      %s36 = sphi 0, %s34
      %s37 = sphi 0, %s35
      %s38 = sphi 0, %s36
      %s50 = sphi 0, %s52
      %s53 = sphi 0, %s50
      %s54 = sphi 0, %s53
      %s70 = sphi 0, %s54
      %s86 = sphi 0, %s88
      %s89 = sphi 0, %s86
      %s90 = sphi 0, %s89
      %s106 = sphi 0, %s90
      %s122 = sphi 0, %s124
      %s125 = sphi 0, %s122
      %s126 = sphi 0, %s125
      %s142 = sphi 0, %s126
      %s146 = sphi 0, %s146
      %s148 = sphi 0, %s146
      %s149 = sphi 0, %s148
      %s163 = sphi 0, %s149
      %s167 = sphi 0, %s167
      %s169 = sphi 0, %s167
      %s170 = sphi 0, %s169
      %s184 = sphi 0, %s170
      %s188 = sphi 0, %s188
      %s190 = sphi 0, %s188
      %s191 = sphi 0, %s190
      %s205 = sphi 0, %s191
      %s209 = sphi 0, %s209
      %s211 = sphi 0, %s209
      %s212 = sphi 0, %s211
      %s226 = sphi 0, %s212
      %s230 = sphi 0, %s230
      %s232 = sphi 0, %s230
      %s233 = sphi 0, %s232
      %s247 = sphi 0, %s233
      %s251 = sphi 0, %s251
      %s253 = sphi 0, %s251
      %s254 = sphi 0, %s253
      %s268 = sphi 0, %s254
      %s276 = sphi 0, %s278
      %s279 = sphi 0, %s276
      %s280 = sphi 0, %s279
      %s296 = sphi 0, %s280
    $region4: #{tpu_custom_call.1} parent=1 // loop_header_branch
      %29 = sbr.rel (%p27) target = $region8
    $region5: #{tpu_custom_call.1} parent=1 // loop_body
      %s31 = ssub.s32 %s26, 1
      %s32 = ssub.s32 %s26, 2
      %s39 = sadd.s32 1, %s34
      %p40 = scmp.ge.s32.totalorder %s39, 1
      %s41 = scalar_select %p40, 0, %s39
      %s42 = sadd.s32 1, %s33
      %s43 = scalar_select %p40, %s42, %s33
      %p44 = scmp.ge.s32.totalorder %s43, 2
      %s45 = scalar_select %p44, 0, %s43
      %s46 = ssub.s32 %s33, %s45
      %s47 = ssub.s32 %s34, %s41
      %s48 = sor.u32 %s46, %s47
      %p49 = scmp.eq.s32.totalorder %s48, 0
      %s51 = sadd.s32 %s50, 1
      %s52 = scalar_select %p49, %s50, %s51
      %p55 = pneg %p49
      %p56 = scmp.eq.s32.totalorder %s26, 1
      %p57 = por %p55, %p56
      %p58 = scmp.ne.s32.totalorder %s50, %s53
      %p59 = scmp.eq.s32.totalorder %s26, 0
      %p60 = por %p58, %p59
      %p61 = scmp.ne.s32.totalorder %s50, %s53
      %p62 = scmp.eq.s32.totalorder %s31, 1
      %p63 = por %p61, %p62
      %p64 = scmp.ne.s32.totalorder %s53, %s54
      %p65 = scmp.eq.s32.totalorder %s31, 0
      %p66 = por %p64, %p65
      %p67 = scmp.ne.s32.totalorder %s53, %s54
      %p68 = scmp.eq.s32.totalorder %s32, 1
      %p69 = por %p67, %p68
      %p71 = scmp.ne.s32.totalorder %s54, %s70
      %p72 = scmp.eq.s32.totalorder %s32, 0
      %p73 = por %p71, %p72
      %s74 = smul.u32 %s34, 8
      %s75 = ssub.s32 %s74, 1
      %p76 = scmp.gt.s32.totalorder %s75, 0
      %s77 = scalar_select %p76, %s75, 0
      %s78 = smul.u32 %s41, 8
      %s79 = ssub.s32 %s78, 1
      %p80 = scmp.gt.s32.totalorder %s79, 0
      %s81 = scalar_select %p80, %s79, 0
      %s82 = ssub.s32 %s33, %s45
      %s83 = ssub.s32 %s77, %s81
      %s84 = sor.u32 %s82, %s83
      %p85 = scmp.eq.s32.totalorder %s84, 0
      %s87 = sadd.s32 %s86, 1
      %s88 = scalar_select %p85, %s86, %s87
      %p91 = pneg %p85
      %p92 = scmp.eq.s32.totalorder %s26, 1
      %p93 = por %p91, %p92
      %p94 = scmp.ne.s32.totalorder %s86, %s89
      %p95 = scmp.eq.s32.totalorder %s26, 0
      %p96 = por %p94, %p95
      %p97 = scmp.ne.s32.totalorder %s86, %s89
      %p98 = scmp.eq.s32.totalorder %s31, 1
      %p99 = por %p97, %p98
      %p100 = scmp.ne.s32.totalorder %s89, %s90
      %p101 = scmp.eq.s32.totalorder %s31, 0
      %p102 = por %p100, %p101
      %p103 = scmp.ne.s32.totalorder %s89, %s90
      %p104 = scmp.eq.s32.totalorder %s32, 1
      %p105 = por %p103, %p104
      %p107 = scmp.ne.s32.totalorder %s90, %s106
      %p108 = scmp.eq.s32.totalorder %s32, 0
      %p109 = por %p107, %p108
      %s110 = smul.u32 %s34, 8
      %s111 = sadd.s32 %s110, 8
      %p112 = scmp.lt.s32.totalorder %s111, 7
      %s113 = scalar_select %p112, %s111, 7
      %s114 = smul.u32 %s41, 8
      %s115 = sadd.s32 %s114, 8
      %p116 = scmp.lt.s32.totalorder %s115, 7
      %s117 = scalar_select %p116, %s115, 7
      %s118 = ssub.s32 %s33, %s45
      %s119 = ssub.s32 %s113, %s117
      %s120 = sor.u32 %s118, %s119
      %p121 = scmp.eq.s32.totalorder %s120, 0
      %s123 = sadd.s32 %s122, 1
      %s124 = scalar_select %p121, %s122, %s123
      %p127 = pneg %p121
      %p128 = scmp.eq.s32.totalorder %s26, 1
      %p129 = por %p127, %p128
      %p130 = scmp.ne.s32.totalorder %s122, %s125
      %p131 = scmp.eq.s32.totalorder %s26, 0
      %p132 = por %p130, %p131
      %p133 = scmp.ne.s32.totalorder %s122, %s125
      %p134 = scmp.eq.s32.totalorder %s31, 1
      %p135 = por %p133, %p134
      %p136 = scmp.ne.s32.totalorder %s125, %s126
      %p137 = scmp.eq.s32.totalorder %s31, 0
      %p138 = por %p136, %p137
      %p139 = scmp.ne.s32.totalorder %s125, %s126
      %p140 = scmp.eq.s32.totalorder %s32, 1
      %p141 = por %p139, %p140
      %p143 = scmp.ne.s32.totalorder %s126, %s142
      %p144 = scmp.eq.s32.totalorder %s32, 0
      %p145 = por %p143, %p144
      %s147 = sadd.s32 %s146, 1
      %p150 = scmp.eq.s32.totalorder %s26, 1
      %p151 = scmp.ne.s32.totalorder %s146, %s148
      %p152 = scmp.eq.s32.totalorder %s26, 0
      %p153 = por %p151, %p152
      %p154 = scmp.ne.s32.totalorder %s146, %s148
      %p155 = scmp.eq.s32.totalorder %s31, 1
      %p156 = por %p154, %p155
      %p157 = scmp.ne.s32.totalorder %s148, %s149
      %p158 = scmp.eq.s32.totalorder %s31, 0
      %p159 = por %p157, %p158
      %p160 = scmp.ne.s32.totalorder %s148, %s149
      %p161 = scmp.eq.s32.totalorder %s32, 1
      %p162 = por %p160, %p161
      %p164 = scmp.ne.s32.totalorder %s149, %s163
      %p165 = scmp.eq.s32.totalorder %s32, 0
      %p166 = por %p164, %p165
      %s168 = sadd.s32 %s167, 1
      %p171 = scmp.eq.s32.totalorder %s26, 1
      %p172 = scmp.ne.s32.totalorder %s167, %s169
      %p173 = scmp.eq.s32.totalorder %s26, 0
      %p174 = por %p172, %p173
      %p175 = scmp.ne.s32.totalorder %s167, %s169
      %p176 = scmp.eq.s32.totalorder %s31, 1
      %p177 = por %p175, %p176
      %p178 = scmp.ne.s32.totalorder %s169, %s170
      %p179 = scmp.eq.s32.totalorder %s31, 0
      %p180 = por %p178, %p179
      %p181 = scmp.ne.s32.totalorder %s169, %s170
      %p182 = scmp.eq.s32.totalorder %s32, 1
      %p183 = por %p181, %p182
      %p185 = scmp.ne.s32.totalorder %s170, %s184
      %p186 = scmp.eq.s32.totalorder %s32, 0
      %p187 = por %p185, %p186
      %s189 = sadd.s32 %s188, 1
      %p192 = scmp.eq.s32.totalorder %s26, 1
      %p193 = scmp.ne.s32.totalorder %s188, %s190
      %p194 = scmp.eq.s32.totalorder %s26, 0
      %p195 = por %p193, %p194
      %p196 = scmp.ne.s32.totalorder %s188, %s190
      %p197 = scmp.eq.s32.totalorder %s31, 1
      %p198 = por %p196, %p197
      %p199 = scmp.ne.s32.totalorder %s190, %s191
      %p200 = scmp.eq.s32.totalorder %s31, 0
      %p201 = por %p199, %p200
      %p202 = scmp.ne.s32.totalorder %s190, %s191
      %p203 = scmp.eq.s32.totalorder %s32, 1
      %p204 = por %p202, %p203
      %p206 = scmp.ne.s32.totalorder %s191, %s205
      %p207 = scmp.eq.s32.totalorder %s32, 0
      %p208 = por %p206, %p207
      %s210 = sadd.s32 %s209, 1
      %p213 = scmp.eq.s32.totalorder %s26, 1
      %p214 = scmp.ne.s32.totalorder %s209, %s211
      %p215 = scmp.eq.s32.totalorder %s26, 0
      %p216 = por %p214, %p215
      %p217 = scmp.ne.s32.totalorder %s209, %s211
      %p218 = scmp.eq.s32.totalorder %s31, 1
      %p219 = por %p217, %p218
      %p220 = scmp.ne.s32.totalorder %s211, %s212
      %p221 = scmp.eq.s32.totalorder %s31, 0
      %p222 = por %p220, %p221
      %p223 = scmp.ne.s32.totalorder %s211, %s212
      %p224 = scmp.eq.s32.totalorder %s32, 1
      %p225 = por %p223, %p224
      %p227 = scmp.ne.s32.totalorder %s212, %s226
      %p228 = scmp.eq.s32.totalorder %s32, 0
      %p229 = por %p227, %p228
      %s231 = sadd.s32 %s230, 1
      %p234 = scmp.eq.s32.totalorder %s26, 1
      %p235 = scmp.ne.s32.totalorder %s230, %s232
      %p236 = scmp.eq.s32.totalorder %s26, 0
      %p237 = por %p235, %p236
      %p238 = scmp.ne.s32.totalorder %s230, %s232
      %p239 = scmp.eq.s32.totalorder %s31, 1
      %p240 = por %p238, %p239
      %p241 = scmp.ne.s32.totalorder %s232, %s233
      %p242 = scmp.eq.s32.totalorder %s31, 0
      %p243 = por %p241, %p242
      %p244 = scmp.ne.s32.totalorder %s232, %s233
      %p245 = scmp.eq.s32.totalorder %s32, 1
      %p246 = por %p244, %p245
      %p248 = scmp.ne.s32.totalorder %s233, %s247
      %p249 = scmp.eq.s32.totalorder %s32, 0
      %p250 = por %p248, %p249
      %s252 = sadd.s32 %s251, 1
      %p255 = scmp.eq.s32.totalorder %s26, 1
      %p256 = scmp.ne.s32.totalorder %s251, %s253
      %p257 = scmp.eq.s32.totalorder %s26, 0
      %p258 = por %p256, %p257
      %p259 = scmp.ne.s32.totalorder %s251, %s253
      %p260 = scmp.eq.s32.totalorder %s31, 1
      %p261 = por %p259, %p260
      %p262 = scmp.ne.s32.totalorder %s253, %s254
      %p263 = scmp.eq.s32.totalorder %s31, 0
      %p264 = por %p262, %p263
      %p265 = scmp.ne.s32.totalorder %s253, %s254
      %p266 = scmp.eq.s32.totalorder %s32, 1
      %p267 = por %p265, %p266
      %p269 = scmp.ne.s32.totalorder %s254, %s268
      %p270 = scmp.eq.s32.totalorder %s32, 0
      %p271 = por %p269, %p270
      %s272 = ssub.s32 %s33, %s45
      %s273 = ssub.s32 %s34, %s41
      %s274 = sor.u32 %s272, %s273
      %p275 = scmp.eq.s32.totalorder %s274, 0
      %s277 = sadd.s32 %s276, 1
      %s278 = scalar_select %p275, %s276, %s277
      %p281 = pneg %p275
      %p282 = scmp.eq.s32.totalorder %s26, 1
      %p283 = por %p281, %p282
      %p284 = scmp.ne.s32.totalorder %s276, %s279
      %p285 = scmp.eq.s32.totalorder %s26, 0
      %p286 = por %p284, %p285
      %p287 = scmp.ne.s32.totalorder %s276, %s279
      %p288 = scmp.eq.s32.totalorder %s31, 1
      %p289 = por %p287, %p288
      %p290 = scmp.ne.s32.totalorder %s279, %s280
      %p291 = scmp.eq.s32.totalorder %s31, 0
      %p292 = por %p290, %p291
      %p293 = scmp.ne.s32.totalorder %s279, %s280
      %p294 = scmp.eq.s32.totalorder %s32, 1
      %p295 = por %p293, %p294
      %p297 = scmp.ne.s32.totalorder %s280, %s296
      %p298 = scmp.eq.s32.totalorder %s32, 0
      %p299 = por %p297, %p298
      %p300 = scmp.le.s32.totalorder 1, %s26
      %p301 = scmp.lt.s32.totalorder %s26, 3
      %p302 = pnand %p300, %p301
      %p303 = pneg %p302
      // Predicated region
      $region9: #{tpu_custom_call.1} parent=5 // pred_check
        _
      $region10: #{tpu_custom_call.1} parent=5 // pred_check_branch
        %305 = sbr.rel (%p302) target = $region12
      $region11: #{tpu_custom_call.1} parent=5 // pred_region
        %s306 = ssub.s32 %s26, 1
        // Predicated region
        $region13: #{tpu_custom_call.1} parent=11 // pred_check
          %p307 = pneg %p159
        $region14: #{tpu_custom_call.1} parent=11 // pred_check_branch
          %309 = sbr.rel (%p307) target = $region16
        $region15: #{tpu_custom_call.1} parent=11 // pred_region
          %311 = vsyncadd [#allocation9], 0
          %s312 = sshll.u32 %s3, 4
          %s313 = int_to_ptr.hbm [resolvable:$true] %s312
          %s314 = sshll.u32 [#allocation8], 4
          %s315 = int_to_ptr.vmem [resolvable:$true] %s314
          %320 = dma.hbm_to_vmem [thread:$0]  %s313, 1024, %s315, [#allocation9], 64, 64, 4
        $region16: #{tpu_custom_call.1} parent=11 // pred_fallthru
          _
        // Predicated region
        $region17: #{tpu_custom_call.1} parent=11 // pred_check
          %p321 = pneg %p180
        $region18: #{tpu_custom_call.1} parent=11 // pred_check_branch
          %323 = sbr.rel (%p321) target = $region20
        $region19: #{tpu_custom_call.1} parent=11 // pred_region
          _
        $region20: #{tpu_custom_call.1} parent=11 // pred_fallthru
          _
        // Predicated region
        $region21: #{tpu_custom_call.1} parent=11 // pred_check
          %p324 = pneg %p201
        $region22: #{tpu_custom_call.1} parent=11 // pred_check_branch
          %326 = sbr.rel (%p324) target = $region24
        $region23: #{tpu_custom_call.1} parent=11 // pred_region
          %328 = vsyncadd [#allocation9], 0
          %s329 = sshll.u32 %s5, 4
          %s330 = int_to_ptr.hbm [resolvable:$true] %s329
          %s331 = sshll.u32 [#allocation10], 4
          %s332 = int_to_ptr.vmem [resolvable:$true] %s331
          %337 = dma.hbm_to_vmem [thread:$0]  %s330, 9216, %s332, [#allocation9], 64, 64, 4
        $region24: #{tpu_custom_call.1} parent=11 // pred_fallthru
          _
        // Predicated region
        $region25: #{tpu_custom_call.1} parent=11 // pred_check
          %p338 = pneg %p222
        $region26: #{tpu_custom_call.1} parent=11 // pred_check_branch
          %340 = sbr.rel (%p338) target = $region28
        $region27: #{tpu_custom_call.1} parent=11 // pred_region
          _
        $region28: #{tpu_custom_call.1} parent=11 // pred_fallthru
          _
        // Predicated region
        $region29: #{tpu_custom_call.1} parent=11 // pred_check
          %p341 = pneg %p243
        $region30: #{tpu_custom_call.1} parent=11 // pred_check_branch
          %343 = sbr.rel (%p341) target = $region32
        $region31: #{tpu_custom_call.1} parent=11 // pred_region
          %345 = vsyncadd [#allocation12], 0
          %s346 = sshll.u32 %s7, 4
          %s347 = int_to_ptr.hbm [resolvable:$true] %s346
          %s348 = sshll.u32 [#allocation11], 4
          %s349 = int_to_ptr.vmem [resolvable:$true] %s348
          %354 = dma.hbm_to_vmem [thread:$0]  %s347, 1024, %s349, [#allocation12], 64, 64, 4
        $region32: #{tpu_custom_call.1} parent=11 // pred_fallthru
          _
        // Predicated region
        $region33: #{tpu_custom_call.1} parent=11 // pred_check
          %p355 = pneg %p264
        $region34: #{tpu_custom_call.1} parent=11 // pred_check_branch
          %357 = sbr.rel (%p355) target = $region36
        $region35: #{tpu_custom_call.1} parent=11 // pred_region
          _
        $region36: #{tpu_custom_call.1} parent=11 // pred_fallthru
          _
      $region12: #{tpu_custom_call.1} parent=5 // pred_fallthru
        _
      %p358 = scmp.lt.s32.totalorder %s26, 2
      // Predicated region
      $region37: #{tpu_custom_call.1} parent=5 // pred_check
        %p359 = pneg %p358
      $region38: #{tpu_custom_call.1} parent=5 // pred_check_branch
        %361 = sbr.rel (%p359) target = $region40
      $region39: #{tpu_custom_call.1} parent=5 // pred_region
        // Predicated region
        $region41: #{tpu_custom_call.1} parent=39 // pred_check
          %p362 = pneg %p60
        $region42: #{tpu_custom_call.1} parent=39 // pred_check_branch
          %364 = sbr.rel (%p362) target = $region44
        $region43: #{tpu_custom_call.1} parent=39 // pred_region
          %s365 = sand.u32 %s50, 1
          %s366 = scalar_lea.sflag [#allocation3], %s365
          %s367 = sand.u32 %s50, 1
          %s368 = smul.addr %s367, 32
          %s369 = scalar_lea.vmem [#allocation2], %s368
          %s370 = smul.u32 8, %s34
          %372 = vsyncadd %s366, 0
          %s373 = smul.addr %s33, 8
          %s374 = sadd.s32 %s370, %s373
          %s375 = smul.addr %s374, 4
          %s376 = scalar_lea.hbm %s0, %s375
          %s377 = sshll.u32 %s376, 4
          %s378 = int_to_ptr.hbm [resolvable:$true] %s377
          %s379 = sshll.u32 %s369, 4
          %s380 = int_to_ptr.vmem [resolvable:$true] %s379
          %385 = dma.hbm_to_vmem [thread:$0]  %s378, 512, %s380, %s366, 64, 64, 4
        $region44: #{tpu_custom_call.1} parent=39 // pred_fallthru
          _
        // Predicated region
        $region45: #{tpu_custom_call.1} parent=39 // pred_check
          %p386 = pneg %p96
        $region46: #{tpu_custom_call.1} parent=39 // pred_check_branch
          %388 = sbr.rel (%p386) target = $region48
        $region47: #{tpu_custom_call.1} parent=39 // pred_region
          %s389 = sand.u32 %s26, 1
          %s390 = scalar_lea.sflag [#allocation6], %s389
          %s391 = sand.u32 %s86, 1
          %s392 = smul.addr %s391, 4
          %s393 = scalar_lea.vmem [#allocation5], %s392
          %s394 = smul.u32 %s34, 8
          %s395 = ssub.s32 %s394, 1
          %p396 = scmp.gt.s32.totalorder %s395, 0
          %s397 = scalar_select %p396, %s395, 0
          %399 = vsyncadd %s390, 0
          %s400 = smul.addr %s33, 8
          %s401 = sadd.s32 %s397, %s400
          %s402 = smul.addr %s401, 4
          %s403 = scalar_lea.hbm %s1, %s402
          %s405 = sshll.u32 %s403, 4
          %s406 = int_to_ptr.hbm [resolvable:$true] %s405
          %s407 = sshll.u32 %s393, 4
          %s408 = int_to_ptr.vmem [resolvable:$true] %s407
          %410 = dma.hbm_to_vmem [thread:$0]  %s406, 64, %s408, %s390
        $region48: #{tpu_custom_call.1} parent=39 // pred_fallthru
          _
        // Predicated region
        $region49: #{tpu_custom_call.1} parent=39 // pred_check
          %p411 = pneg %p132
        $region50: #{tpu_custom_call.1} parent=39 // pred_check_branch
          %413 = sbr.rel (%p411) target = $region52
        $region51: #{tpu_custom_call.1} parent=39 // pred_region
          %s414 = sand.u32 %s26, 1
          %s415 = scalar_lea.sflag [#allocation6], %s414
          %s416 = sand.u32 %s122, 1
          %s417 = smul.addr %s416, 4
          %s418 = scalar_lea.vmem [#allocation7], %s417
          %s419 = smul.u32 %s34, 8
          %s420 = sadd.s32 %s419, 8
          %p421 = scmp.lt.s32.totalorder %s420, 7
          %s422 = scalar_select %p421, %s420, 7
          %424 = vsyncadd %s415, 0
          %s425 = smul.addr %s33, 8
          %s426 = sadd.s32 %s422, %s425
          %s427 = smul.addr %s426, 4
          %s428 = scalar_lea.hbm %s2, %s427
          %s430 = sshll.u32 %s428, 4
          %s431 = int_to_ptr.hbm [resolvable:$true] %s430
          %s432 = sshll.u32 %s418, 4
          %s433 = int_to_ptr.vmem [resolvable:$true] %s432
          %435 = dma.hbm_to_vmem [thread:$0]  %s431, 64, %s433, %s415
        $region52: #{tpu_custom_call.1} parent=39 // pred_fallthru
          _
      $region40: #{tpu_custom_call.1} parent=5 // pred_fallthru
        _
      %p436 = scmp.le.s32.totalorder 1, %s26
      %p437 = scmp.lt.s32.totalorder %s26, 3
      %p438 = pnand %p436, %p437
      %p439 = pneg %p438
      // Predicated region
      $region53: #{tpu_custom_call.1} parent=5 // pred_check
        _
      $region54: #{tpu_custom_call.1} parent=5 // pred_check_branch
        %441 = sbr.rel (%p438) target = $region56
      $region55: #{tpu_custom_call.1} parent=5 // pred_region
        %s442 = ssub.s32 %s26, 1
        %s443 = sand.u32 %s53, 1
        %s444 = scalar_lea.sflag [#allocation3], %s443
        %s445 = sand.u32 %s53, 1
        %s446 = smul.addr %s445, 32
        %s447 = scalar_lea.vmem [#allocation2], %s446
        // Predicated region
        $region57: #{tpu_custom_call.1} parent=55 // pred_check
          %p448 = pneg %p66
        $region58: #{tpu_custom_call.1} parent=55 // pred_check_branch
          %450 = sbr.rel (%p448) target = $region60
        $region59: #{tpu_custom_call.1} parent=55 // pred_region
          %452 = dma.done %s444, 512
        $region60: #{tpu_custom_call.1} parent=55 // pred_fallthru
          _
        %s453 = sand.u32 %s31, 1
        %s454 = scalar_lea.sflag [#allocation6], %s453
        %s455 = sand.u32 %s89, 1
        %s456 = smul.addr %s455, 4
        %s457 = scalar_lea.vmem [#allocation5], %s456
        // Predicated region
        $region61: #{tpu_custom_call.1} parent=55 // pred_check
          %p458 = pneg %p102
        $region62: #{tpu_custom_call.1} parent=55 // pred_check_branch
          %460 = sbr.rel (%p458) target = $region64
        $region63: #{tpu_custom_call.1} parent=55 // pred_region
          %462 = dma.done %s454, 64
        $region64: #{tpu_custom_call.1} parent=55 // pred_fallthru
          _
        %s463 = sand.u32 %s31, 1
        %s464 = scalar_lea.sflag [#allocation6], %s463
        %s465 = sand.u32 %s125, 1
        %s466 = smul.addr %s465, 4
        %s467 = scalar_lea.vmem [#allocation7], %s466
        // Predicated region
        $region65: #{tpu_custom_call.1} parent=55 // pred_check
          %p468 = pneg %p138
        $region66: #{tpu_custom_call.1} parent=55 // pred_check_branch
          %470 = sbr.rel (%p468) target = $region68
        $region67: #{tpu_custom_call.1} parent=55 // pred_region
          %472 = dma.done %s464, 64
        $region68: #{tpu_custom_call.1} parent=55 // pred_fallthru
          _
        // Predicated region
        $region69: #{tpu_custom_call.1} parent=55 // pred_check
          %p473 = pneg %p159
        $region70: #{tpu_custom_call.1} parent=55 // pred_check_branch
          %475 = sbr.rel (%p473) target = $region72
        $region71: #{tpu_custom_call.1} parent=55 // pred_region
          %477 = dma.done [#allocation9], 1024
        $region72: #{tpu_custom_call.1} parent=55 // pred_fallthru
          _
        // Predicated region
        $region73: #{tpu_custom_call.1} parent=55 // pred_check
          %p478 = pneg %p201
        $region74: #{tpu_custom_call.1} parent=55 // pred_check_branch
          %480 = sbr.rel (%p478) target = $region76
        $region75: #{tpu_custom_call.1} parent=55 // pred_region
          %482 = dma.done [#allocation9], 9216
        $region76: #{tpu_custom_call.1} parent=55 // pred_fallthru
          _
        // Predicated region
        $region77: #{tpu_custom_call.1} parent=55 // pred_check
          %p483 = pneg %p243
        $region78: #{tpu_custom_call.1} parent=55 // pred_check_branch
          %485 = sbr.rel (%p483) target = $region80
        $region79: #{tpu_custom_call.1} parent=55 // pred_region
          %487 = dma.done [#allocation12], 1024
        $region80: #{tpu_custom_call.1} parent=55 // pred_fallthru
          _
        %s488 = sand.u32 %s53, 1
        %s489 = scalar_lea.sflag [#allocation3], %s488
        %s490 = sand.u32 %s53, 1
        %s491 = smul.addr %s490, 32
        %s492 = scalar_lea.vmem [#allocation2], %s491
        %p493 = pneg %p66
        %p494 = pneg %p63
        %s495 = sand.u32 %s31, 1
        %s496 = scalar_lea.sflag [#allocation6], %s495
        %s497 = sand.u32 %s89, 1
        %s498 = smul.addr %s497, 4
        %s499 = scalar_lea.vmem [#allocation5], %s498
        %p500 = pneg %p102
        %p501 = pneg %p99
        %s502 = sand.u32 %s31, 1
        %s503 = scalar_lea.sflag [#allocation6], %s502
        %s504 = sand.u32 %s125, 1
        %s505 = smul.addr %s504, 4
        %s506 = scalar_lea.vmem [#allocation7], %s505
        %p507 = pneg %p138
        %p508 = pneg %p135
        %p509 = pneg %p159
        %p510 = pneg %p156
        %p511 = pneg %p180
        %p512 = pneg %p177
        %p513 = pneg %p201
        %p514 = pneg %p198
        %p515 = pneg %p222
        %p516 = pneg %p219
        %p517 = pneg %p243
        %p518 = pneg %p240
        %p519 = pneg %p264
        %p520 = pneg %p261
        %p521 = pneg %p292
        %p522 = pneg %p289
        %s523 = sand.u32 %s279, 1
        %s524 = scalar_lea.sflag [#allocation4], %s523
        %s525 = sand.u32 %s279, 1
        %s526 = smul.addr %s525, 32
        %s527 = scalar_lea.vmem [#allocation13], %s526
        %s528 = smul.u32 8, %s36
        %s529 = smul.u32 %s36, 8
        %s530 = ssub.s32 %s529, 1
        %p531 = scmp.gt.s32.totalorder %s530, 0
        %s532 = scalar_select %p531, %s530, 0
        %s533 = smul.u32 %s36, 8
        %s534 = sadd.s32 %s533, 8
        %p535 = scmp.lt.s32.totalorder %s534, 7
        %s536 = scalar_select %p535, %s534, 7
        %s537 = smul.u32 8, %s36
        %v539 = vld [vmem:[%s457] sm:$0xf]
        %v540 = vld [vmem:[%s447] sm:$0xf]
        %v541 = vld [vmem:[%s447 + $0x4] sm:$0xf]
        %v542 = vld [vmem:[%s447 + $0x8] sm:$0xf]
        %v543 = vld [vmem:[%s447 + $0xc] sm:$0xf]
        %v544 = vld [vmem:[%s447 + $0x10] sm:$0xf]
        %v545 = vld [vmem:[%s447 + $0x14] sm:$0xf]
        %v546 = vld [vmem:[%s447 + $0x18] sm:$0xf]
        %v547 = vld [vmem:[%s447 + $0x1c] sm:$0xf]
        %v548 = vld [vmem:[%s467] sm:$0xf]
        %v549 = vld [vmem:[#allocation8] sm:$0xf]
        %v550 = vld [vmem:[#allocation8 + $0x4] sm:$0xf]
        %v551 = vld [vmem:[#allocation8 + $0x8] sm:$0xf]
        %v552 = vld [vmem:[#allocation8 + $0xc] sm:$0xf]
        %v553 = vld [vmem:[#allocation8 + $0x10] sm:$0xf]
        %v554 = vld [vmem:[#allocation8 + $0x14] sm:$0xf]
        %v555 = vld [vmem:[#allocation8 + $0x18] sm:$0xf]
        %v556 = vld [vmem:[#allocation8 + $0x1c] sm:$0xf]
        %v557 = vld [vmem:[#allocation8 + $0x20] sm:$0xf]
        %v558 = vld [vmem:[#allocation8 + $0x24] sm:$0xf]
        %v559 = vld [vmem:[#allocation8 + $0x28] sm:$0xf]
        %v560 = vld [vmem:[#allocation8 + $0x2c] sm:$0xf]
        %v561 = vld [vmem:[#allocation8 + $0x30] sm:$0xf]
        %v562 = vld [vmem:[#allocation8 + $0x34] sm:$0xf]
        %v563 = vld [vmem:[#allocation8 + $0x38] sm:$0xf]
        %v564 = vld [vmem:[#allocation8 + $0x3c] sm:$0xf]
        %v565 = vld [vmem:[%s4] sm:$0x1]
        %v567 = vperm.slane %v565, 0
        %v579 = vunpack.c.l.b16 %v539
        %v580 = vunpack.c.l.b16 %v540
        %v581 = vunpack.c.l.b16 %v541
        %v582 = vunpack.c.l.b16 %v542
        %v583 = vunpack.c.l.b16 %v543
        %v584 = vunpack.c.l.b16 %v544
        %v585 = vunpack.c.l.b16 %v545
        %v586 = vunpack.c.l.b16 %v546
        %v587 = vunpack.c.l.b16 %v547
        %v588 = vunpack.c.l.b16 %v548
        %v589 = vpack.c.b16 %v580, %v579
        %v590 = vpack.c.b16 %v582, %v581
        %v591 = vpack.c.b16 %v584, %v583
        %v592 = vpack.c.b16 %v586, %v585
        %v593 = vpack.c.b16 %v588, %v587
        %v615 = vunpack.c.l.b16 %v549
        %v616 = vunpack.c.l.b16 %v550
        %v617 = vunpack.c.l.b16 %v551
        %v618 = vunpack.c.l.b16 %v552
        %v619 = vunpack.c.l.b16 %v553
        %v620 = vunpack.c.l.b16 %v554
        %v621 = vunpack.c.l.b16 %v555
        %v622 = vunpack.c.l.b16 %v556
        %v623 = vunpack.c.l.b16 %v557
        %v624 = vunpack.c.l.b16 %v558
        %v625 = vunpack.c.l.b16 %v559
        %v626 = vunpack.c.l.b16 %v560
        %v627 = vunpack.c.l.b16 %v561
        %v628 = vunpack.c.l.b16 %v562
        %v629 = vunpack.c.l.b16 %v563
        %v630 = vunpack.c.l.b16 %v564
        %v631 = vpack.c.b16 %v616, %v615
        %v632 = vpack.c.b16 %v618, %v617
        %v633 = vpack.c.b16 %v620, %v619
        %v634 = vpack.c.b16 %v622, %v621
        %v635 = vpack.c.b16 %v624, %v623
        %v636 = vpack.c.b16 %v626, %v625
        %v637 = vpack.c.b16 %v628, %v627
        %v638 = vpack.c.b16 %v630, %v629
        %647 = vmatpush.bf16.msra.mxu0 %v638
        %648 = vmatpush.bf16.msra.mxu0 %v637
        %649 = vmatpush.bf16.msra.mxu0 %v636
        %650 = vmatpush.bf16.msra.mxu0 %v635
        %651 = vmatpush.bf16.msra.mxu0 %v634
        %652 = vmatpush.bf16.msra.mxu0 %v633
        %653 = vmatpush.bf16.msra.mxu0 %v632
        %654 = vmatpush.bf16.msra.mxu0 %v631
        %655 = vmatmul.bf16.gmra.mxu0 %v589
        %v656 = vpop.f32.mrf.mxu0
        %v657 = vadd.f32 %v567, %v656
        %v658 = vpop.f32.mrf.mxu0
        %v659 = vadd.f32 %v567, %v658
        %660 = vmatmul.bf16.gmra.mxu0 %v590
        %v661 = vpop.f32.mrf.mxu0
        %v662 = vadd.f32 %v567, %v661
        %v663 = vpop.f32.mrf.mxu0
        %v664 = vadd.f32 %v567, %v663
        %665 = vmatmul.bf16.gmra.mxu0 %v591
        %v666 = vpop.f32.mrf.mxu0
        %v667 = vadd.f32 %v567, %v666
        %v668 = vpop.f32.mrf.mxu0
        %v669 = vadd.f32 %v567, %v668
        %670 = vmatmul.bf16.gmra.mxu0 %v592
        %v671 = vpop.f32.mrf.mxu0
        %v672 = vadd.f32 %v567, %v671
        %v673 = vpop.f32.mrf.mxu0
        %v674 = vadd.f32 %v567, %v673
        %675 = vmatmul.bf16.gmra.mxu0 %v593
        %v676 = vpop.f32.mrf.mxu0
        %v677 = vadd.f32 %v567, %v676
        %v678 = vpop.f32.mrf.mxu0
        %v679 = vadd.f32 %v567, %v678
        %680 = vdwg.mxu0
        %v681 = vmax.f32 %v657, 0.0
        %v682 = vmax.f32 %v659, 0.0
        %v683 = vmax.f32 %v662, 0.0
        %v684 = vmax.f32 %v664, 0.0
        %v685 = vmax.f32 %v667, 0.0
        %v686 = vmax.f32 %v669, 0.0
        %v687 = vmax.f32 %v672, 0.0
        %v688 = vmax.f32 %v674, 0.0
        %v689 = vmax.f32 %v677, 0.0
        %v690 = vmax.f32 %v679, 0.0
        %p691 = scmp.eq.s32.totalorder %s36, 0
        %s692 = scalar_select %p691, 0.0, 1.0
        %v693 = vstv %s692
        %v694 = vmul.f32 %v681, %v693
        %v695 = vmul.f32 %v690, %v693
        %v696 = vpack.c.bf16 %v694, %v694
        %v697 = vpack.c.bf16 %v682, %v682
        %v698 = vpack.c.bf16 %v683, %v683
        %v699 = vpack.c.bf16 %v684, %v684
        %v700 = vpack.c.bf16 %v685, %v685
        %v701 = vpack.c.bf16 %v686, %v686
        %v702 = vpack.c.bf16 %v687, %v687
        %v703 = vpack.c.bf16 %v688, %v688
        %v704 = vpack.c.bf16 %v689, %v689
        %v705 = vpack.c.bf16 %v695, %v695
        %v716 = vunpack.c.l.b16 %v696
        %v717 = vunpack.c.l.b16 %v697
        %v718 = vunpack.c.l.b16 %v698
        %v719 = vunpack.c.l.b16 %v699
        %v720 = vunpack.c.l.b16 %v700
        %v721 = vunpack.c.l.b16 %v701
        %v722 = vunpack.c.l.b16 %v702
        %v723 = vunpack.c.l.b16 %v703
        %v724 = vunpack.c.l.b16 %v704
        %v725 = vunpack.c.l.b16 %v705
        %v726 = vpack.c.b16 %v716, %v716
        %v727 = vpack.c.b16 %v717, %v717
        %v728 = vpack.c.b16 %v718, %v718
        %v729 = vpack.c.b16 %v719, %v719
        %v730 = vpack.c.b16 %v720, %v720
        %v731 = vpack.c.b16 %v721, %v721
        %v732 = vpack.c.b16 %v722, %v722
        %v733 = vpack.c.b16 %v723, %v723
        %v734 = vpack.c.b16 %v724, %v724
        %v735 = vpack.c.b16 %v725, %v725
        %v737 = vshrl.u32 %v726, 16
        %v739 = vrot.slane %v737, 7
        %v740 = vshll.u32 %v726, 16
        %v742 = vor.u32 %v739, %v740
        %v744 = vshrl.u32 %v727, 16
        %v746 = vrot.slane %v744, 7
        %v747 = vshll.u32 %v727, 16
        %v749 = vor.u32 %v746, %v747
        %v751 = vshrl.u32 %v728, 16
        %v753 = vrot.slane %v751, 7
        %v754 = vshll.u32 %v728, 16
        %v756 = vor.u32 %v753, %v754
        %v758 = vshrl.u32 %v729, 16
        %v760 = vrot.slane %v758, 7
        %v761 = vshll.u32 %v729, 16
        %v763 = vor.u32 %v760, %v761
        %v765 = vshrl.u32 %v730, 16
        %v767 = vrot.slane %v765, 7
        %v768 = vshll.u32 %v730, 16
        %v770 = vor.u32 %v767, %v768
        %v772 = vshrl.u32 %v731, 16
        %v774 = vrot.slane %v772, 7
        %v775 = vshll.u32 %v731, 16
        %v777 = vor.u32 %v774, %v775
        %v779 = vshrl.u32 %v732, 16
        %v781 = vrot.slane %v779, 7
        %v782 = vshll.u32 %v732, 16
        %v784 = vor.u32 %v781, %v782
        %v786 = vshrl.u32 %v733, 16
        %v788 = vrot.slane %v786, 7
        %v789 = vshll.u32 %v733, 16
        %v791 = vor.u32 %v788, %v789
        %v793 = vshrl.u32 %v734, 16
        %v795 = vrot.slane %v793, 7
        %v796 = vshll.u32 %v734, 16
        %v798 = vor.u32 %v795, %v796
        %v800 = vshrl.u32 %v735, 16
        %v802 = vrot.slane %v800, 7
        %v803 = vshll.u32 %v735, 16
        %v805 = vor.u32 %v802, %v803
        %vm816 = vcmask 1040384
        %vm817 = vsmask.f32 256
        %vm818 = vmand %vm816, %vm817
        %v819 = vsel %vm818, 0, %v742
        %v820 = vsel %vm818, 0, %v749
        %v821 = vsel %vm818, 0, %v756
        %v822 = vsel %vm818, 0, %v763
        %v823 = vsel %vm818, 0, %v770
        %v824 = vsel %vm818, 0, %v777
        %v825 = vsel %vm818, 0, %v784
        %v826 = vsel %vm818, 0, %v791
        %v827 = vsel %vm818, 0, %v798
        %v828 = vsel %vm818, 0, %v805
        %v829 = vrot.slane %v740, 1
        %v830 = vor.u32 %v737, %v829
        %v831 = vrot.slane %v747, 1
        %v832 = vor.u32 %v744, %v831
        %v833 = vrot.slane %v754, 1
        %v834 = vor.u32 %v751, %v833
        %v835 = vrot.slane %v761, 1
        %v836 = vor.u32 %v758, %v835
        %v837 = vrot.slane %v768, 1
        %v838 = vor.u32 %v765, %v837
        %v839 = vrot.slane %v775, 1
        %v840 = vor.u32 %v772, %v839
        %v841 = vrot.slane %v782, 1
        %v842 = vor.u32 %v779, %v841
        %v843 = vrot.slane %v789, 1
        %v844 = vor.u32 %v786, %v843
        %v845 = vrot.slane %v796, 1
        %v846 = vor.u32 %v793, %v845
        %v847 = vrot.slane %v803, 1
        %v848 = vor.u32 %v800, %v847
        %vm859 = vcmask 1043456
        %vm860 = vsmask.f32 3328
        %vm861 = vmand %vm859, %vm860
        %v862 = vsel %vm861, %v830, 0
        %v863 = vsel %vm861, %v832, 0
        %v864 = vsel %vm861, %v834, 0
        %v865 = vsel %vm861, %v836, 0
        %v866 = vsel %vm861, %v838, 0
        %v867 = vsel %vm861, %v840, 0
        %v868 = vsel %vm861, %v842, 0
        %v869 = vsel %vm861, %v844, 0
        %v870 = vsel %vm861, %v846, 0
        %v871 = vsel %vm861, %v848, 0
        %v888 = vunpack.c.l.b16 %v819
        %v889 = vunpack.c.l.b16 %v862
        %v890 = vunpack.c.l.b16 %v820
        %v891 = vunpack.c.l.b16 %v863
        %v892 = vunpack.c.l.b16 %v821
        %v893 = vunpack.c.l.b16 %v864
        %v894 = vunpack.c.l.b16 %v822
        %v895 = vunpack.c.l.b16 %v865
        %v896 = vunpack.c.l.b16 %v823
        %v897 = vunpack.c.l.b16 %v866
        %v898 = vunpack.c.l.b16 %v824
        %v899 = vunpack.c.l.b16 %v867
        %v900 = vunpack.c.l.b16 %v825
        %v901 = vunpack.c.l.b16 %v868
        %v902 = vunpack.c.l.b16 %v826
        %v903 = vunpack.c.l.b16 %v869
        %v904 = vld [vmem:[#allocation10] sm:$0xf]
        %v905 = vld [vmem:[#allocation10 + $0x4] sm:$0xf]
        %v906 = vld [vmem:[#allocation10 + $0x8] sm:$0xf]
        %v907 = vld [vmem:[#allocation10 + $0xc] sm:$0xf]
        %v908 = vld [vmem:[#allocation10 + $0x10] sm:$0xf]
        %v909 = vld [vmem:[#allocation10 + $0x14] sm:$0xf]
        %v910 = vld [vmem:[#allocation10 + $0x18] sm:$0xf]
        %v911 = vld [vmem:[#allocation10 + $0x1c] sm:$0xf]
        %v912 = vld [vmem:[#allocation10 + $0x20] sm:$0xf]
        %v913 = vld [vmem:[#allocation10 + $0x24] sm:$0xf]
        %v914 = vld [vmem:[#allocation10 + $0x28] sm:$0xf]
        %v915 = vld [vmem:[#allocation10 + $0x2c] sm:$0xf]
        %v916 = vld [vmem:[#allocation10 + $0x30] sm:$0xf]
        %v917 = vld [vmem:[#allocation10 + $0x34] sm:$0xf]
        %v918 = vld [vmem:[#allocation10 + $0x38] sm:$0xf]
        %v919 = vld [vmem:[#allocation10 + $0x3c] sm:$0xf]
        %v920 = vld [vmem:[#allocation10 + $0x40] sm:$0xf]
        %v921 = vld [vmem:[#allocation10 + $0x44] sm:$0xf]
        %v922 = vld [vmem:[#allocation10 + $0x48] sm:$0xf]
        %v923 = vld [vmem:[#allocation10 + $0x4c] sm:$0xf]
        %v924 = vld [vmem:[#allocation10 + $0x50] sm:$0xf]
        %v925 = vld [vmem:[#allocation10 + $0x54] sm:$0xf]
        %v926 = vld [vmem:[#allocation10 + $0x58] sm:$0xf]
        %v927 = vld [vmem:[#allocation10 + $0x5c] sm:$0xf]
        %v928 = vld [vmem:[#allocation10 + $0x60] sm:$0xf]
        %v929 = vld [vmem:[#allocation10 + $0x64] sm:$0xf]
        %v930 = vld [vmem:[#allocation10 + $0x68] sm:$0xf]
        %v931 = vld [vmem:[#allocation10 + $0x6c] sm:$0xf]
        %v932 = vld [vmem:[#allocation10 + $0x70] sm:$0xf]
        %v933 = vld [vmem:[#allocation10 + $0x74] sm:$0xf]
        %v934 = vld [vmem:[#allocation10 + $0x78] sm:$0xf]
        %v935 = vld [vmem:[#allocation10 + $0x7c] sm:$0xf]
        %v936 = vld [vmem:[#allocation10 + $0x80] sm:$0xf]
        %v937 = vld [vmem:[#allocation10 + $0x84] sm:$0xf]
        %v938 = vld [vmem:[#allocation10 + $0x88] sm:$0xf]
        %v939 = vld [vmem:[#allocation10 + $0x8c] sm:$0xf]
        %v940 = vld [vmem:[#allocation10 + $0x90] sm:$0xf]
        %v941 = vld [vmem:[#allocation10 + $0x94] sm:$0xf]
        %v942 = vld [vmem:[#allocation10 + $0x98] sm:$0xf]
        %v943 = vld [vmem:[#allocation10 + $0x9c] sm:$0xf]
        %v944 = vld [vmem:[#allocation10 + $0xa0] sm:$0xf]
        %v945 = vld [vmem:[#allocation10 + $0xa4] sm:$0xf]
        %v946 = vld [vmem:[#allocation10 + $0xa8] sm:$0xf]
        %v947 = vld [vmem:[#allocation10 + $0xac] sm:$0xf]
        %v948 = vld [vmem:[#allocation10 + $0xb0] sm:$0xf]
        %v949 = vld [vmem:[#allocation10 + $0xb4] sm:$0xf]
        %v950 = vld [vmem:[#allocation10 + $0xb8] sm:$0xf]
        %v951 = vld [vmem:[#allocation10 + $0xbc] sm:$0xf]
        %v954 = vunpack.c.l.b16 %v827
        %v955 = vunpack.c.l.b16 %v870
        %s956 = scalar_lea.vmem [#allocation10], 192
        %v957 = vld [vmem:[%s956] sm:$0xf]
        %v958 = vld [vmem:[%s956 + $0x4] sm:$0xf]
        %v959 = vld [vmem:[%s956 + $0x8] sm:$0xf]
        %v960 = vld [vmem:[%s956 + $0xc] sm:$0xf]
        %v961 = vld [vmem:[%s956 + $0x10] sm:$0xf]
        %v962 = vld [vmem:[%s956 + $0x14] sm:$0xf]
        %v963 = vld [vmem:[%s956 + $0x18] sm:$0xf]
        %v964 = vld [vmem:[%s956 + $0x1c] sm:$0xf]
        %v965 = vld [vmem:[%s956 + $0x20] sm:$0xf]
        %v966 = vld [vmem:[%s956 + $0x24] sm:$0xf]
        %v967 = vld [vmem:[%s956 + $0x28] sm:$0xf]
        %v968 = vld [vmem:[%s956 + $0x2c] sm:$0xf]
        %v969 = vld [vmem:[%s956 + $0x30] sm:$0xf]
        %v970 = vld [vmem:[%s956 + $0x34] sm:$0xf]
        %v971 = vld [vmem:[%s956 + $0x38] sm:$0xf]
        %v972 = vld [vmem:[%s956 + $0x3c] sm:$0xf]
        %v973 = vld [vmem:[%s956 + $0x40] sm:$0xf]
        %v974 = vld [vmem:[%s956 + $0x44] sm:$0xf]
        %v975 = vld [vmem:[%s956 + $0x48] sm:$0xf]
        %v976 = vld [vmem:[%s956 + $0x4c] sm:$0xf]
        %v977 = vld [vmem:[%s956 + $0x50] sm:$0xf]
        %v978 = vld [vmem:[%s956 + $0x54] sm:$0xf]
        %v979 = vld [vmem:[%s956 + $0x58] sm:$0xf]
        %v980 = vld [vmem:[%s956 + $0x5c] sm:$0xf]
        %v981 = vld [vmem:[%s956 + $0x60] sm:$0xf]
        %v982 = vld [vmem:[%s956 + $0x64] sm:$0xf]
        %v983 = vld [vmem:[%s956 + $0x68] sm:$0xf]
        %v984 = vld [vmem:[%s956 + $0x6c] sm:$0xf]
        %v985 = vld [vmem:[%s956 + $0x70] sm:$0xf]
        %v986 = vld [vmem:[%s956 + $0x74] sm:$0xf]
        %v987 = vld [vmem:[%s956 + $0x78] sm:$0xf]
        %v988 = vld [vmem:[%s956 + $0x7c] sm:$0xf]
        %v989 = vld [vmem:[%s956 + $0x80] sm:$0xf]
        %v990 = vld [vmem:[%s956 + $0x84] sm:$0xf]
        %v991 = vld [vmem:[%s956 + $0x88] sm:$0xf]
        %v992 = vld [vmem:[%s956 + $0x8c] sm:$0xf]
        %v993 = vld [vmem:[%s956 + $0x90] sm:$0xf]
        %v994 = vld [vmem:[%s956 + $0x94] sm:$0xf]
        %v995 = vld [vmem:[%s956 + $0x98] sm:$0xf]
        %v996 = vld [vmem:[%s956 + $0x9c] sm:$0xf]
        %v997 = vld [vmem:[%s956 + $0xa0] sm:$0xf]
        %v998 = vld [vmem:[%s956 + $0xa4] sm:$0xf]
        %v999 = vld [vmem:[%s956 + $0xa8] sm:$0xf]
        %v1000 = vld [vmem:[%s956 + $0xac] sm:$0xf]
        %v1001 = vld [vmem:[%s956 + $0xb0] sm:$0xf]
        %v1002 = vld [vmem:[%s956 + $0xb4] sm:$0xf]
        %v1003 = vld [vmem:[%s956 + $0xb8] sm:$0xf]
        %v1004 = vld [vmem:[%s956 + $0xbc] sm:$0xf]
        %v1005 = vpack.c.b16 %v892, %v890
        %v1006 = vpack.c.b16 %v718, %v717
        %v1007 = vpack.c.b16 %v893, %v891
        %v1008 = vpack.c.b16 %v896, %v894
        %v1009 = vpack.c.b16 %v720, %v719
        %v1010 = vpack.c.b16 %v897, %v895
        %v1011 = vpack.c.b16 %v900, %v898
        %v1012 = vpack.c.b16 %v722, %v721
        %v1013 = vpack.c.b16 %v901, %v899
        %v1014 = vpack.c.b16 %v954, %v902
        %v1015 = vpack.c.b16 %v724, %v723
        %v1016 = vpack.c.b16 %v955, %v903
        %v1077 = vunpack.c.l.b16 %v957
        %v1078 = vunpack.c.l.b16 %v958
        %v1079 = vunpack.c.l.b16 %v959
        %v1080 = vunpack.c.l.b16 %v960
        %v1081 = vunpack.c.l.b16 %v961
        %v1082 = vunpack.c.l.b16 %v962
        %v1083 = vunpack.c.l.b16 %v963
        %v1084 = vunpack.c.l.b16 %v964
        %v1085 = vunpack.c.l.b16 %v965
        %v1086 = vunpack.c.l.b16 %v966
        %v1087 = vunpack.c.l.b16 %v967
        %v1088 = vunpack.c.l.b16 %v968
        %v1089 = vunpack.c.l.b16 %v969
        %v1090 = vunpack.c.l.b16 %v970
        %v1091 = vunpack.c.l.b16 %v971
        %v1092 = vunpack.c.l.b16 %v972
        %v1093 = vunpack.c.l.b16 %v973
        %v1094 = vunpack.c.l.b16 %v974
        %v1095 = vunpack.c.l.b16 %v975
        %v1096 = vunpack.c.l.b16 %v976
        %v1097 = vunpack.c.l.b16 %v977
        %v1098 = vunpack.c.l.b16 %v978
        %v1099 = vunpack.c.l.b16 %v979
        %v1100 = vunpack.c.l.b16 %v980
        %v1101 = vunpack.c.l.b16 %v981
        %v1102 = vunpack.c.l.b16 %v982
        %v1103 = vunpack.c.l.b16 %v983
        %v1104 = vunpack.c.l.b16 %v984
        %v1105 = vunpack.c.l.b16 %v985
        %v1106 = vunpack.c.l.b16 %v986
        %v1107 = vunpack.c.l.b16 %v987
        %v1108 = vunpack.c.l.b16 %v988
        %v1109 = vunpack.c.l.b16 %v989
        %v1110 = vunpack.c.l.b16 %v990
        %v1111 = vunpack.c.l.b16 %v991
        %v1112 = vunpack.c.l.b16 %v992
        %v1113 = vunpack.c.l.b16 %v993
        %v1114 = vunpack.c.l.b16 %v994
        %v1115 = vunpack.c.l.b16 %v995
        %v1116 = vunpack.c.l.b16 %v996
        %v1117 = vunpack.c.l.b16 %v997
        %v1118 = vunpack.c.l.b16 %v998
        %v1119 = vunpack.c.l.b16 %v999
        %v1120 = vunpack.c.l.b16 %v1000
        %v1121 = vunpack.c.l.b16 %v1001
        %v1122 = vunpack.c.l.b16 %v1002
        %v1123 = vunpack.c.l.b16 %v1003
        %v1124 = vunpack.c.l.b16 %v1004
        %v1125 = vpack.c.b16 %v1078, %v1077
        %v1126 = vpack.c.b16 %v1080, %v1079
        %v1127 = vpack.c.b16 %v1082, %v1081
        %v1128 = vpack.c.b16 %v1084, %v1083
        %v1129 = vpack.c.b16 %v1086, %v1085
        %v1130 = vpack.c.b16 %v1088, %v1087
        %v1131 = vpack.c.b16 %v1090, %v1089
        %v1132 = vpack.c.b16 %v1092, %v1091
        %v1133 = vpack.c.b16 %v1094, %v1093
        %v1134 = vpack.c.b16 %v1096, %v1095
        %v1135 = vpack.c.b16 %v1098, %v1097
        %v1136 = vpack.c.b16 %v1100, %v1099
        %v1137 = vpack.c.b16 %v1102, %v1101
        %v1138 = vpack.c.b16 %v1104, %v1103
        %v1139 = vpack.c.b16 %v1106, %v1105
        %v1140 = vpack.c.b16 %v1108, %v1107
        %v1141 = vpack.c.b16 %v1110, %v1109
        %v1142 = vpack.c.b16 %v1112, %v1111
        %v1143 = vpack.c.b16 %v1114, %v1113
        %v1144 = vpack.c.b16 %v1116, %v1115
        %v1145 = vpack.c.b16 %v1118, %v1117
        %v1146 = vpack.c.b16 %v1120, %v1119
        %v1147 = vpack.c.b16 %v1122, %v1121
        %v1148 = vpack.c.b16 %v1124, %v1123
        %1173 = vmatpush.bf16.msra.mxu0 %v1132
        %1174 = vmatpush.bf16.msra.mxu0 %v1131
        %1175 = vmatpush.bf16.msra.mxu0 %v1130
        %1176 = vmatpush.bf16.msra.mxu0 %v1129
        %1177 = vmatpush.bf16.msra.mxu0 %v1128
        %1178 = vmatpush.bf16.msra.mxu0 %v1127
        %1179 = vmatpush.bf16.msra.mxu0 %v1126
        %1180 = vmatpush.bf16.msra.mxu0 %v1125
        %1181 = vmatmul.bf16.gmra.mxu0 %v1005
        %v1182 = vpop.f32.mrf.mxu0
        %v1183 = vadd.f32 0.0, %v1182
        %v1184 = vpop.f32.mrf.mxu0
        %v1185 = vadd.f32 0.0, %v1184
        %1186 = vmatmul.bf16.gmra.mxu0 %v1008
        %v1187 = vpop.f32.mrf.mxu0
        %v1188 = vadd.f32 0.0, %v1187
        %v1189 = vpop.f32.mrf.mxu0
        %v1190 = vadd.f32 0.0, %v1189
        %1191 = vmatmul.bf16.gmra.mxu0 %v1011
        %v1192 = vpop.f32.mrf.mxu0
        %v1193 = vadd.f32 0.0, %v1192
        %v1194 = vpop.f32.mrf.mxu0
        %v1195 = vadd.f32 0.0, %v1194
        %1196 = vmatmul.bf16.gmra.mxu0 %v1014
        %v1197 = vpop.f32.mrf.mxu0
        %v1198 = vadd.f32 0.0, %v1197
        %v1199 = vpop.f32.mrf.mxu0
        %v1200 = vadd.f32 0.0, %v1199
        %1201 = vdwg.mxu0
        %1202 = vmatpush.bf16.msra.mxu0 %v1140
        %1203 = vmatpush.bf16.msra.mxu0 %v1139
        %1204 = vmatpush.bf16.msra.mxu0 %v1138
        %1205 = vmatpush.bf16.msra.mxu0 %v1137
        %1206 = vmatpush.bf16.msra.mxu0 %v1136
        %1207 = vmatpush.bf16.msra.mxu0 %v1135
        %1208 = vmatpush.bf16.msra.mxu0 %v1134
        %1209 = vmatpush.bf16.msra.mxu0 %v1133
        %1210 = vmatmul.bf16.gmra.mxu0 %v1006
        %v1211 = vpop.f32.mrf.mxu0
        %v1212 = vadd.f32 %v1183, %v1211
        %v1213 = vpop.f32.mrf.mxu0
        %v1214 = vadd.f32 %v1185, %v1213
        %1215 = vmatmul.bf16.gmra.mxu0 %v1009
        %v1216 = vpop.f32.mrf.mxu0
        %v1217 = vadd.f32 %v1188, %v1216
        %v1218 = vpop.f32.mrf.mxu0
        %v1219 = vadd.f32 %v1190, %v1218
        %1220 = vmatmul.bf16.gmra.mxu0 %v1012
        %v1221 = vpop.f32.mrf.mxu0
        %v1222 = vadd.f32 %v1193, %v1221
        %v1223 = vpop.f32.mrf.mxu0
        %v1224 = vadd.f32 %v1195, %v1223
        %1225 = vmatmul.bf16.gmra.mxu0 %v1015
        %v1226 = vpop.f32.mrf.mxu0
        %v1227 = vadd.f32 %v1198, %v1226
        %v1228 = vpop.f32.mrf.mxu0
        %v1229 = vadd.f32 %v1200, %v1228
        %1230 = vdwg.mxu0
        %1231 = vmatpush.bf16.msra.mxu0 %v1148
        %1232 = vmatpush.bf16.msra.mxu0 %v1147
        %1233 = vmatpush.bf16.msra.mxu0 %v1146
        %1234 = vmatpush.bf16.msra.mxu0 %v1145
        %1235 = vmatpush.bf16.msra.mxu0 %v1144
        %1236 = vmatpush.bf16.msra.mxu0 %v1143
        %1237 = vmatpush.bf16.msra.mxu0 %v1142
        %1238 = vmatpush.bf16.msra.mxu0 %v1141
        %1239 = vmatmul.bf16.gmra.mxu0 %v1007
        %v1240 = vpop.f32.mrf.mxu0
        %v1241 = vadd.f32 %v1212, %v1240
        %v1242 = vpop.f32.mrf.mxu0
        %v1243 = vadd.f32 %v1214, %v1242
        %1244 = vmatmul.bf16.gmra.mxu0 %v1010
        %v1245 = vpop.f32.mrf.mxu0
        %v1246 = vadd.f32 %v1217, %v1245
        %v1247 = vpop.f32.mrf.mxu0
        %v1248 = vadd.f32 %v1219, %v1247
        %1249 = vmatmul.bf16.gmra.mxu0 %v1013
        %v1250 = vpop.f32.mrf.mxu0
        %v1251 = vadd.f32 %v1222, %v1250
        %v1252 = vpop.f32.mrf.mxu0
        %v1253 = vadd.f32 %v1224, %v1252
        %1254 = vmatmul.bf16.gmra.mxu0 %v1016
        %v1255 = vpop.f32.mrf.mxu0
        %v1256 = vadd.f32 %v1227, %v1255
        %v1257 = vpop.f32.mrf.mxu0
        %v1258 = vadd.f32 %v1229, %v1257
        %1259 = vdwg.mxu0
        %v1260 = vpack.c.b16 %v890, %v888
        %v1261 = vpack.c.b16 %v717, %v716
        %v1262 = vpack.c.b16 %v891, %v889
        %v1263 = vpack.c.b16 %v894, %v892
        %v1264 = vpack.c.b16 %v719, %v718
        %v1265 = vpack.c.b16 %v895, %v893
        %v1266 = vpack.c.b16 %v898, %v896
        %v1267 = vpack.c.b16 %v721, %v720
        %v1268 = vpack.c.b16 %v899, %v897
        %v1269 = vpack.c.b16 %v902, %v900
        %v1270 = vpack.c.b16 %v723, %v722
        %v1271 = vpack.c.b16 %v903, %v901
        %v1332 = vunpack.c.l.b16 %v904
        %v1333 = vunpack.c.l.b16 %v905
        %v1334 = vunpack.c.l.b16 %v906
        %v1335 = vunpack.c.l.b16 %v907
        %v1336 = vunpack.c.l.b16 %v908
        %v1337 = vunpack.c.l.b16 %v909
        %v1338 = vunpack.c.l.b16 %v910
        %v1339 = vunpack.c.l.b16 %v911
        %v1340 = vunpack.c.l.b16 %v912
        %v1341 = vunpack.c.l.b16 %v913
        %v1342 = vunpack.c.l.b16 %v914
        %v1343 = vunpack.c.l.b16 %v915
        %v1344 = vunpack.c.l.b16 %v916
        %v1345 = vunpack.c.l.b16 %v917
        %v1346 = vunpack.c.l.b16 %v918
        %v1347 = vunpack.c.l.b16 %v919
        %v1348 = vunpack.c.l.b16 %v920
        %v1349 = vunpack.c.l.b16 %v921
        %v1350 = vunpack.c.l.b16 %v922
        %v1351 = vunpack.c.l.b16 %v923
        %v1352 = vunpack.c.l.b16 %v924
        %v1353 = vunpack.c.l.b16 %v925
        %v1354 = vunpack.c.l.b16 %v926
        %v1355 = vunpack.c.l.b16 %v927
        %v1356 = vunpack.c.l.b16 %v928
        %v1357 = vunpack.c.l.b16 %v929
        %v1358 = vunpack.c.l.b16 %v930
        %v1359 = vunpack.c.l.b16 %v931
        %v1360 = vunpack.c.l.b16 %v932
        %v1361 = vunpack.c.l.b16 %v933
        %v1362 = vunpack.c.l.b16 %v934
        %v1363 = vunpack.c.l.b16 %v935
        %v1364 = vunpack.c.l.b16 %v936
        %v1365 = vunpack.c.l.b16 %v937
        %v1366 = vunpack.c.l.b16 %v938
        %v1367 = vunpack.c.l.b16 %v939
        %v1368 = vunpack.c.l.b16 %v940
        %v1369 = vunpack.c.l.b16 %v941
        %v1370 = vunpack.c.l.b16 %v942
        %v1371 = vunpack.c.l.b16 %v943
        %v1372 = vunpack.c.l.b16 %v944
        %v1373 = vunpack.c.l.b16 %v945
        %v1374 = vunpack.c.l.b16 %v946
        %v1375 = vunpack.c.l.b16 %v947
        %v1376 = vunpack.c.l.b16 %v948
        %v1377 = vunpack.c.l.b16 %v949
        %v1378 = vunpack.c.l.b16 %v950
        %v1379 = vunpack.c.l.b16 %v951
        %v1380 = vpack.c.b16 %v1333, %v1332
        %v1381 = vpack.c.b16 %v1335, %v1334
        %v1382 = vpack.c.b16 %v1337, %v1336
        %v1383 = vpack.c.b16 %v1339, %v1338
        %v1384 = vpack.c.b16 %v1341, %v1340
        %v1385 = vpack.c.b16 %v1343, %v1342
        %v1386 = vpack.c.b16 %v1345, %v1344
        %v1387 = vpack.c.b16 %v1347, %v1346
        %v1388 = vpack.c.b16 %v1349, %v1348
        %v1389 = vpack.c.b16 %v1351, %v1350
        %v1390 = vpack.c.b16 %v1353, %v1352
        %v1391 = vpack.c.b16 %v1355, %v1354
        %v1392 = vpack.c.b16 %v1357, %v1356
        %v1393 = vpack.c.b16 %v1359, %v1358
        %v1394 = vpack.c.b16 %v1361, %v1360
        %v1395 = vpack.c.b16 %v1363, %v1362
        %v1396 = vpack.c.b16 %v1365, %v1364
        %v1397 = vpack.c.b16 %v1367, %v1366
        %v1398 = vpack.c.b16 %v1369, %v1368
        %v1399 = vpack.c.b16 %v1371, %v1370
        %v1400 = vpack.c.b16 %v1373, %v1372
        %v1401 = vpack.c.b16 %v1375, %v1374
        %v1402 = vpack.c.b16 %v1377, %v1376
        %v1403 = vpack.c.b16 %v1379, %v1378
        %1428 = vmatpush.bf16.msra.mxu0 %v1387
        %1429 = vmatpush.bf16.msra.mxu0 %v1386
        %1430 = vmatpush.bf16.msra.mxu0 %v1385
        %1431 = vmatpush.bf16.msra.mxu0 %v1384
        %1432 = vmatpush.bf16.msra.mxu0 %v1383
        %1433 = vmatpush.bf16.msra.mxu0 %v1382
        %1434 = vmatpush.bf16.msra.mxu0 %v1381
        %1435 = vmatpush.bf16.msra.mxu0 %v1380
        %1436 = vmatmul.bf16.gmra.mxu0 %v1260
        %v1437 = vpop.f32.mrf.mxu0
        %v1438 = vadd.f32 %v1241, %v1437
        %v1439 = vpop.f32.mrf.mxu0
        %v1440 = vadd.f32 %v1243, %v1439
        %1441 = vmatmul.bf16.gmra.mxu0 %v1263
        %v1442 = vpop.f32.mrf.mxu0
        %v1443 = vadd.f32 %v1246, %v1442
        %v1444 = vpop.f32.mrf.mxu0
        %v1445 = vadd.f32 %v1248, %v1444
        %1446 = vmatmul.bf16.gmra.mxu0 %v1266
        %v1447 = vpop.f32.mrf.mxu0
        %v1448 = vadd.f32 %v1251, %v1447
        %v1449 = vpop.f32.mrf.mxu0
        %v1450 = vadd.f32 %v1253, %v1449
        %1451 = vmatmul.bf16.gmra.mxu0 %v1269
        %v1452 = vpop.f32.mrf.mxu0
        %v1453 = vadd.f32 %v1256, %v1452
        %v1454 = vpop.f32.mrf.mxu0
        %v1455 = vadd.f32 %v1258, %v1454
        %1456 = vdwg.mxu0
        %1457 = vmatpush.bf16.msra.mxu0 %v1395
        %1458 = vmatpush.bf16.msra.mxu0 %v1394
        %1459 = vmatpush.bf16.msra.mxu0 %v1393
        %1460 = vmatpush.bf16.msra.mxu0 %v1392
        %1461 = vmatpush.bf16.msra.mxu0 %v1391
        %1462 = vmatpush.bf16.msra.mxu0 %v1390
        %1463 = vmatpush.bf16.msra.mxu0 %v1389
        %1464 = vmatpush.bf16.msra.mxu0 %v1388
        %1465 = vmatmul.bf16.gmra.mxu0 %v1261
        %v1466 = vpop.f32.mrf.mxu0
        %v1467 = vadd.f32 %v1438, %v1466
        %v1468 = vpop.f32.mrf.mxu0
        %v1469 = vadd.f32 %v1440, %v1468
        %1470 = vmatmul.bf16.gmra.mxu0 %v1264
        %v1471 = vpop.f32.mrf.mxu0
        %v1472 = vadd.f32 %v1443, %v1471
        %v1473 = vpop.f32.mrf.mxu0
        %v1474 = vadd.f32 %v1445, %v1473
        %1475 = vmatmul.bf16.gmra.mxu0 %v1267
        %v1476 = vpop.f32.mrf.mxu0
        %v1477 = vadd.f32 %v1448, %v1476
        %v1478 = vpop.f32.mrf.mxu0
        %v1479 = vadd.f32 %v1450, %v1478
        %1480 = vmatmul.bf16.gmra.mxu0 %v1270
        %v1481 = vpop.f32.mrf.mxu0
        %v1482 = vadd.f32 %v1453, %v1481
        %v1483 = vpop.f32.mrf.mxu0
        %v1484 = vadd.f32 %v1455, %v1483
        %1485 = vdwg.mxu0
        %1486 = vmatpush.bf16.msra.mxu0 %v1403
        %1487 = vmatpush.bf16.msra.mxu0 %v1402
        %1488 = vmatpush.bf16.msra.mxu0 %v1401
        %1489 = vmatpush.bf16.msra.mxu0 %v1400
        %1490 = vmatpush.bf16.msra.mxu0 %v1399
        %1491 = vmatpush.bf16.msra.mxu0 %v1398
        %1492 = vmatpush.bf16.msra.mxu0 %v1397
        %1493 = vmatpush.bf16.msra.mxu0 %v1396
        %1494 = vmatmul.bf16.gmra.mxu0 %v1262
        %v1495 = vpop.f32.mrf.mxu0
        %v1496 = vadd.f32 %v1467, %v1495
        %v1497 = vpop.f32.mrf.mxu0
        %v1498 = vadd.f32 %v1469, %v1497
        %1499 = vmatmul.bf16.gmra.mxu0 %v1265
        %v1500 = vpop.f32.mrf.mxu0
        %v1501 = vadd.f32 %v1472, %v1500
        %v1502 = vpop.f32.mrf.mxu0
        %v1503 = vadd.f32 %v1474, %v1502
        %1504 = vmatmul.bf16.gmra.mxu0 %v1268
        %v1505 = vpop.f32.mrf.mxu0
        %v1506 = vadd.f32 %v1477, %v1505
        %v1507 = vpop.f32.mrf.mxu0
        %v1508 = vadd.f32 %v1479, %v1507
        %1509 = vmatmul.bf16.gmra.mxu0 %v1271
        %v1510 = vpop.f32.mrf.mxu0
        %v1511 = vadd.f32 %v1482, %v1510
        %v1512 = vpop.f32.mrf.mxu0
        %v1513 = vadd.f32 %v1484, %v1512
        %1514 = vdwg.mxu0
        %v1517 = vunpack.c.l.b16 %v828
        %v1518 = vunpack.c.l.b16 %v871
        %s1519 = scalar_lea.vmem [#allocation10], 384
        %v1520 = vld [vmem:[%s1519] sm:$0xf]
        %v1521 = vld [vmem:[%s1519 + $0x4] sm:$0xf]
        %v1522 = vld [vmem:[%s1519 + $0x8] sm:$0xf]
        %v1523 = vld [vmem:[%s1519 + $0xc] sm:$0xf]
        %v1524 = vld [vmem:[%s1519 + $0x10] sm:$0xf]
        %v1525 = vld [vmem:[%s1519 + $0x14] sm:$0xf]
        %v1526 = vld [vmem:[%s1519 + $0x18] sm:$0xf]
        %v1527 = vld [vmem:[%s1519 + $0x1c] sm:$0xf]
        %v1528 = vld [vmem:[%s1519 + $0x20] sm:$0xf]
        %v1529 = vld [vmem:[%s1519 + $0x24] sm:$0xf]
        %v1530 = vld [vmem:[%s1519 + $0x28] sm:$0xf]
        %v1531 = vld [vmem:[%s1519 + $0x2c] sm:$0xf]
        %v1532 = vld [vmem:[%s1519 + $0x30] sm:$0xf]
        %v1533 = vld [vmem:[%s1519 + $0x34] sm:$0xf]
        %v1534 = vld [vmem:[%s1519 + $0x38] sm:$0xf]
        %v1535 = vld [vmem:[%s1519 + $0x3c] sm:$0xf]
        %v1536 = vld [vmem:[%s1519 + $0x40] sm:$0xf]
        %v1537 = vld [vmem:[%s1519 + $0x44] sm:$0xf]
        %v1538 = vld [vmem:[%s1519 + $0x48] sm:$0xf]
        %v1539 = vld [vmem:[%s1519 + $0x4c] sm:$0xf]
        %v1540 = vld [vmem:[%s1519 + $0x50] sm:$0xf]
        %v1541 = vld [vmem:[%s1519 + $0x54] sm:$0xf]
        %v1542 = vld [vmem:[%s1519 + $0x58] sm:$0xf]
        %v1543 = vld [vmem:[%s1519 + $0x5c] sm:$0xf]
        %v1544 = vld [vmem:[%s1519 + $0x60] sm:$0xf]
        %v1545 = vld [vmem:[%s1519 + $0x64] sm:$0xf]
        %v1546 = vld [vmem:[%s1519 + $0x68] sm:$0xf]
        %v1547 = vld [vmem:[%s1519 + $0x6c] sm:$0xf]
        %v1548 = vld [vmem:[%s1519 + $0x70] sm:$0xf]
        %v1549 = vld [vmem:[%s1519 + $0x74] sm:$0xf]
        %v1550 = vld [vmem:[%s1519 + $0x78] sm:$0xf]
        %v1551 = vld [vmem:[%s1519 + $0x7c] sm:$0xf]
        %v1552 = vld [vmem:[%s1519 + $0x80] sm:$0xf]
        %v1553 = vld [vmem:[%s1519 + $0x84] sm:$0xf]
        %v1554 = vld [vmem:[%s1519 + $0x88] sm:$0xf]
        %v1555 = vld [vmem:[%s1519 + $0x8c] sm:$0xf]
        %v1556 = vld [vmem:[%s1519 + $0x90] sm:$0xf]
        %v1557 = vld [vmem:[%s1519 + $0x94] sm:$0xf]
        %v1558 = vld [vmem:[%s1519 + $0x98] sm:$0xf]
        %v1559 = vld [vmem:[%s1519 + $0x9c] sm:$0xf]
        %v1560 = vld [vmem:[%s1519 + $0xa0] sm:$0xf]
        %v1561 = vld [vmem:[%s1519 + $0xa4] sm:$0xf]
        %v1562 = vld [vmem:[%s1519 + $0xa8] sm:$0xf]
        %v1563 = vld [vmem:[%s1519 + $0xac] sm:$0xf]
        %v1564 = vld [vmem:[%s1519 + $0xb0] sm:$0xf]
        %v1565 = vld [vmem:[%s1519 + $0xb4] sm:$0xf]
        %v1566 = vld [vmem:[%s1519 + $0xb8] sm:$0xf]
        %v1567 = vld [vmem:[%s1519 + $0xbc] sm:$0xf]
        %v1568 = vpack.c.b16 %v1517, %v954
        %v1569 = vpack.c.b16 %v725, %v724
        %v1570 = vpack.c.b16 %v1518, %v955
        %v1622 = vunpack.c.l.b16 %v1520
        %v1623 = vunpack.c.l.b16 %v1521
        %v1624 = vunpack.c.l.b16 %v1522
        %v1625 = vunpack.c.l.b16 %v1523
        %v1626 = vunpack.c.l.b16 %v1524
        %v1627 = vunpack.c.l.b16 %v1525
        %v1628 = vunpack.c.l.b16 %v1526
        %v1629 = vunpack.c.l.b16 %v1527
        %v1630 = vunpack.c.l.b16 %v1528
        %v1631 = vunpack.c.l.b16 %v1529
        %v1632 = vunpack.c.l.b16 %v1530
        %v1633 = vunpack.c.l.b16 %v1531
        %v1634 = vunpack.c.l.b16 %v1532
        %v1635 = vunpack.c.l.b16 %v1533
        %v1636 = vunpack.c.l.b16 %v1534
        %v1637 = vunpack.c.l.b16 %v1535
        %v1638 = vunpack.c.l.b16 %v1536
        %v1639 = vunpack.c.l.b16 %v1537
        %v1640 = vunpack.c.l.b16 %v1538
        %v1641 = vunpack.c.l.b16 %v1539
        %v1642 = vunpack.c.l.b16 %v1540
        %v1643 = vunpack.c.l.b16 %v1541
        %v1644 = vunpack.c.l.b16 %v1542
        %v1645 = vunpack.c.l.b16 %v1543
        %v1646 = vunpack.c.l.b16 %v1544
        %v1647 = vunpack.c.l.b16 %v1545
        %v1648 = vunpack.c.l.b16 %v1546
        %v1649 = vunpack.c.l.b16 %v1547
        %v1650 = vunpack.c.l.b16 %v1548
        %v1651 = vunpack.c.l.b16 %v1549
        %v1652 = vunpack.c.l.b16 %v1550
        %v1653 = vunpack.c.l.b16 %v1551
        %v1654 = vunpack.c.l.b16 %v1552
        %v1655 = vunpack.c.l.b16 %v1553
        %v1656 = vunpack.c.l.b16 %v1554
        %v1657 = vunpack.c.l.b16 %v1555
        %v1658 = vunpack.c.l.b16 %v1556
        %v1659 = vunpack.c.l.b16 %v1557
        %v1660 = vunpack.c.l.b16 %v1558
        %v1661 = vunpack.c.l.b16 %v1559
        %v1662 = vunpack.c.l.b16 %v1560
        %v1663 = vunpack.c.l.b16 %v1561
        %v1664 = vunpack.c.l.b16 %v1562
        %v1665 = vunpack.c.l.b16 %v1563
        %v1666 = vunpack.c.l.b16 %v1564
        %v1667 = vunpack.c.l.b16 %v1565
        %v1668 = vunpack.c.l.b16 %v1566
        %v1669 = vunpack.c.l.b16 %v1567
        %v1670 = vpack.c.b16 %v1623, %v1622
        %v1671 = vpack.c.b16 %v1625, %v1624
        %v1672 = vpack.c.b16 %v1627, %v1626
        %v1673 = vpack.c.b16 %v1629, %v1628
        %v1674 = vpack.c.b16 %v1631, %v1630
        %v1675 = vpack.c.b16 %v1633, %v1632
        %v1676 = vpack.c.b16 %v1635, %v1634
        %v1677 = vpack.c.b16 %v1637, %v1636
        %v1678 = vpack.c.b16 %v1639, %v1638
        %v1679 = vpack.c.b16 %v1641, %v1640
        %v1680 = vpack.c.b16 %v1643, %v1642
        %v1681 = vpack.c.b16 %v1645, %v1644
        %v1682 = vpack.c.b16 %v1647, %v1646
        %v1683 = vpack.c.b16 %v1649, %v1648
        %v1684 = vpack.c.b16 %v1651, %v1650
        %v1685 = vpack.c.b16 %v1653, %v1652
        %v1686 = vpack.c.b16 %v1655, %v1654
        %v1687 = vpack.c.b16 %v1657, %v1656
        %v1688 = vpack.c.b16 %v1659, %v1658
        %v1689 = vpack.c.b16 %v1661, %v1660
        %v1690 = vpack.c.b16 %v1663, %v1662
        %v1691 = vpack.c.b16 %v1665, %v1664
        %v1692 = vpack.c.b16 %v1667, %v1666
        %v1693 = vpack.c.b16 %v1669, %v1668
        %1718 = vmatpush.bf16.msra.mxu0 %v1677
        %1719 = vmatpush.bf16.msra.mxu0 %v1676
        %1720 = vmatpush.bf16.msra.mxu0 %v1675
        %1721 = vmatpush.bf16.msra.mxu0 %v1674
        %1722 = vmatpush.bf16.msra.mxu0 %v1673
        %1723 = vmatpush.bf16.msra.mxu0 %v1672
        %1724 = vmatpush.bf16.msra.mxu0 %v1671
        %1725 = vmatpush.bf16.msra.mxu0 %v1670
        %1726 = vmatmul.bf16.gmra.mxu0 %v1263
        %v1727 = vpop.f32.mrf.mxu0
        %v1728 = vadd.f32 0.0, %v1727
        %v1729 = vpop.f32.mrf.mxu0
        %v1730 = vadd.f32 0.0, %v1729
        %1731 = vmatmul.bf16.gmra.mxu0 %v1266
        %v1732 = vpop.f32.mrf.mxu0
        %v1733 = vadd.f32 0.0, %v1732
        %v1734 = vpop.f32.mrf.mxu0
        %v1735 = vadd.f32 0.0, %v1734
        %1736 = vmatmul.bf16.gmra.mxu0 %v1269
        %v1737 = vpop.f32.mrf.mxu0
        %v1738 = vadd.f32 0.0, %v1737
        %v1739 = vpop.f32.mrf.mxu0
        %v1740 = vadd.f32 0.0, %v1739
        %1741 = vmatmul.bf16.gmra.mxu0 %v1568
        %v1742 = vpop.f32.mrf.mxu0
        %v1743 = vadd.f32 0.0, %v1742
        %v1744 = vpop.f32.mrf.mxu0
        %v1745 = vadd.f32 0.0, %v1744
        %1746 = vdwg.mxu0
        %1747 = vmatpush.bf16.msra.mxu0 %v1685
        %1748 = vmatpush.bf16.msra.mxu0 %v1684
        %1749 = vmatpush.bf16.msra.mxu0 %v1683
        %1750 = vmatpush.bf16.msra.mxu0 %v1682
        %1751 = vmatpush.bf16.msra.mxu0 %v1681
        %1752 = vmatpush.bf16.msra.mxu0 %v1680
        %1753 = vmatpush.bf16.msra.mxu0 %v1679
        %1754 = vmatpush.bf16.msra.mxu0 %v1678
        %1755 = vmatmul.bf16.gmra.mxu0 %v1264
        %v1756 = vpop.f32.mrf.mxu0
        %v1757 = vadd.f32 %v1728, %v1756
        %v1758 = vpop.f32.mrf.mxu0
        %v1759 = vadd.f32 %v1730, %v1758
        %1760 = vmatmul.bf16.gmra.mxu0 %v1267
        %v1761 = vpop.f32.mrf.mxu0
        %v1762 = vadd.f32 %v1733, %v1761
        %v1763 = vpop.f32.mrf.mxu0
        %v1764 = vadd.f32 %v1735, %v1763
        %1765 = vmatmul.bf16.gmra.mxu0 %v1270
        %v1766 = vpop.f32.mrf.mxu0
        %v1767 = vadd.f32 %v1738, %v1766
        %v1768 = vpop.f32.mrf.mxu0
        %v1769 = vadd.f32 %v1740, %v1768
        %1770 = vmatmul.bf16.gmra.mxu0 %v1569
        %v1771 = vpop.f32.mrf.mxu0
        %v1772 = vadd.f32 %v1743, %v1771
        %v1773 = vpop.f32.mrf.mxu0
        %v1774 = vadd.f32 %v1745, %v1773
        %1775 = vdwg.mxu0
        %1776 = vmatpush.bf16.msra.mxu0 %v1693
        %1777 = vmatpush.bf16.msra.mxu0 %v1692
        %1778 = vmatpush.bf16.msra.mxu0 %v1691
        %1779 = vmatpush.bf16.msra.mxu0 %v1690
        %1780 = vmatpush.bf16.msra.mxu0 %v1689
        %1781 = vmatpush.bf16.msra.mxu0 %v1688
        %1782 = vmatpush.bf16.msra.mxu0 %v1687
        %1783 = vmatpush.bf16.msra.mxu0 %v1686
        %1784 = vmatmul.bf16.gmra.mxu0 %v1265
        %v1785 = vpop.f32.mrf.mxu0
        %v1786 = vadd.f32 %v1757, %v1785
        %v1787 = vpop.f32.mrf.mxu0
        %v1788 = vadd.f32 %v1759, %v1787
        %1789 = vmatmul.bf16.gmra.mxu0 %v1268
        %v1790 = vpop.f32.mrf.mxu0
        %v1791 = vadd.f32 %v1762, %v1790
        %v1792 = vpop.f32.mrf.mxu0
        %v1793 = vadd.f32 %v1764, %v1792
        %1794 = vmatmul.bf16.gmra.mxu0 %v1271
        %v1795 = vpop.f32.mrf.mxu0
        %v1796 = vadd.f32 %v1767, %v1795
        %v1797 = vpop.f32.mrf.mxu0
        %v1798 = vadd.f32 %v1769, %v1797
        %1799 = vmatmul.bf16.gmra.mxu0 %v1570
        %v1800 = vpop.f32.mrf.mxu0
        %v1801 = vadd.f32 %v1772, %v1800
        %v1802 = vpop.f32.mrf.mxu0
        %v1803 = vadd.f32 %v1774, %v1802
        %1804 = vdwg.mxu0
        %v1805 = vadd.f32 %v1496, %v1786
        %v1806 = vadd.f32 %v1498, %v1788
        %v1807 = vadd.f32 %v1501, %v1791
        %v1808 = vadd.f32 %v1503, %v1793
        %v1809 = vadd.f32 %v1506, %v1796
        %v1810 = vadd.f32 %v1508, %v1798
        %v1811 = vadd.f32 %v1511, %v1801
        %v1812 = vadd.f32 %v1513, %v1803
        %v1813 = vld [vmem:[%s6] sm:$0x1]
        %v1815 = vperm.slane %v1813, 0
        %v1817 = vadd.f32 %v1805, %v1815
        %v1818 = vadd.f32 %v1806, %v1815
        %v1819 = vadd.f32 %v1807, %v1815
        %v1820 = vadd.f32 %v1808, %v1815
        %v1821 = vadd.f32 %v1809, %v1815
        %v1822 = vadd.f32 %v1810, %v1815
        %v1823 = vadd.f32 %v1811, %v1815
        %v1824 = vadd.f32 %v1812, %v1815
        %v1825 = vmax.f32 %v1817, 0.0
        %v1826 = vmax.f32 %v1818, 0.0
        %v1827 = vmax.f32 %v1819, 0.0
        %v1828 = vmax.f32 %v1820, 0.0
        %v1829 = vmax.f32 %v1821, 0.0
        %v1830 = vmax.f32 %v1822, 0.0
        %v1831 = vmax.f32 %v1823, 0.0
        %v1832 = vmax.f32 %v1824, 0.0
        %v1833 = vpack.c.bf16 %v1826, %v1825
        %v1834 = vpack.c.bf16 %v1828, %v1827
        %v1835 = vpack.c.bf16 %v1830, %v1829
        %v1836 = vpack.c.bf16 %v1832, %v1831
        %v1837 = vld [vmem:[#allocation11] sm:$0xf]
        %v1838 = vld [vmem:[#allocation11 + $0x4] sm:$0xf]
        %v1839 = vld [vmem:[#allocation11 + $0x8] sm:$0xf]
        %v1840 = vld [vmem:[#allocation11 + $0xc] sm:$0xf]
        %v1841 = vld [vmem:[#allocation11 + $0x10] sm:$0xf]
        %v1842 = vld [vmem:[#allocation11 + $0x14] sm:$0xf]
        %v1843 = vld [vmem:[#allocation11 + $0x18] sm:$0xf]
        %v1844 = vld [vmem:[#allocation11 + $0x1c] sm:$0xf]
        %v1845 = vld [vmem:[#allocation11 + $0x20] sm:$0xf]
        %v1846 = vld [vmem:[#allocation11 + $0x24] sm:$0xf]
        %v1847 = vld [vmem:[#allocation11 + $0x28] sm:$0xf]
        %v1848 = vld [vmem:[#allocation11 + $0x2c] sm:$0xf]
        %v1849 = vld [vmem:[#allocation11 + $0x30] sm:$0xf]
        %v1850 = vld [vmem:[#allocation11 + $0x34] sm:$0xf]
        %v1851 = vld [vmem:[#allocation11 + $0x38] sm:$0xf]
        %v1852 = vld [vmem:[#allocation11 + $0x3c] sm:$0xf]
        %v1853 = vld [vmem:[%s8] sm:$0x1]
        %v1855 = vperm.slane %v1853, 0
        %v1873 = vunpack.c.l.b16 %v1837
        %v1874 = vunpack.c.l.b16 %v1838
        %v1875 = vunpack.c.l.b16 %v1839
        %v1876 = vunpack.c.l.b16 %v1840
        %v1877 = vunpack.c.l.b16 %v1841
        %v1878 = vunpack.c.l.b16 %v1842
        %v1879 = vunpack.c.l.b16 %v1843
        %v1880 = vunpack.c.l.b16 %v1844
        %v1881 = vunpack.c.l.b16 %v1845
        %v1882 = vunpack.c.l.b16 %v1846
        %v1883 = vunpack.c.l.b16 %v1847
        %v1884 = vunpack.c.l.b16 %v1848
        %v1885 = vunpack.c.l.b16 %v1849
        %v1886 = vunpack.c.l.b16 %v1850
        %v1887 = vunpack.c.l.b16 %v1851
        %v1888 = vunpack.c.l.b16 %v1852
        %v1889 = vpack.c.b16 %v1874, %v1873
        %v1890 = vpack.c.b16 %v1876, %v1875
        %v1891 = vpack.c.b16 %v1878, %v1877
        %v1892 = vpack.c.b16 %v1880, %v1879
        %v1893 = vpack.c.b16 %v1882, %v1881
        %v1894 = vpack.c.b16 %v1884, %v1883
        %v1895 = vpack.c.b16 %v1886, %v1885
        %v1896 = vpack.c.b16 %v1888, %v1887
        %1905 = vmatpush.bf16.msra.mxu0 %v1896
        %1906 = vmatpush.bf16.msra.mxu0 %v1895
        %1907 = vmatpush.bf16.msra.mxu0 %v1894
        %1908 = vmatpush.bf16.msra.mxu0 %v1893
        %1909 = vmatpush.bf16.msra.mxu0 %v1892
        %1910 = vmatpush.bf16.msra.mxu0 %v1891
        %1911 = vmatpush.bf16.msra.mxu0 %v1890
        %1912 = vmatpush.bf16.msra.mxu0 %v1889
        %1913 = vmatmul.bf16.gmra.mxu0 %v1833
        %v1914 = vpop.f32.mrf.mxu0
        %v1915 = vadd.f32 %v1855, %v1914
        %v1916 = vpop.f32.mrf.mxu0
        %v1917 = vadd.f32 %v1855, %v1916
        %1918 = vmatmul.bf16.gmra.mxu0 %v1834
        %v1919 = vpop.f32.mrf.mxu0
        %v1920 = vadd.f32 %v1855, %v1919
        %v1921 = vpop.f32.mrf.mxu0
        %v1922 = vadd.f32 %v1855, %v1921
        %1923 = vmatmul.bf16.gmra.mxu0 %v1835
        %v1924 = vpop.f32.mrf.mxu0
        %v1925 = vadd.f32 %v1855, %v1924
        %v1926 = vpop.f32.mrf.mxu0
        %v1927 = vadd.f32 %v1855, %v1926
        %1928 = vmatmul.bf16.gmra.mxu0 %v1836
        %v1929 = vpop.f32.mrf.mxu0
        %v1930 = vadd.f32 %v1855, %v1929
        %v1931 = vpop.f32.mrf.mxu0
        %v1932 = vadd.f32 %v1855, %v1931
        %1933 = vdwg.mxu0
        %v1934 = vunpack.c.l.bf16 %v540
        %v1935 = vunpack.c.l.bf16 %v541
        %v1936 = vunpack.c.l.bf16 %v542
        %v1937 = vunpack.c.l.bf16 %v543
        %v1938 = vunpack.c.l.bf16 %v544
        %v1939 = vunpack.c.l.bf16 %v545
        %v1940 = vunpack.c.l.bf16 %v546
        %v1941 = vunpack.c.l.bf16 %v547
        %v1942 = vadd.f32 %v1915, %v1934
        %v1943 = vadd.f32 %v1917, %v1935
        %v1944 = vadd.f32 %v1920, %v1936
        %v1945 = vadd.f32 %v1922, %v1937
        %v1946 = vadd.f32 %v1925, %v1938
        %v1947 = vadd.f32 %v1927, %v1939
        %v1948 = vadd.f32 %v1930, %v1940
        %v1949 = vadd.f32 %v1932, %v1941
        %v1950 = vmax.f32 %v1942, 0.0
        %v1951 = vmax.f32 %v1943, 0.0
        %v1952 = vmax.f32 %v1944, 0.0
        %v1953 = vmax.f32 %v1945, 0.0
        %v1954 = vmax.f32 %v1946, 0.0
        %v1955 = vmax.f32 %v1947, 0.0
        %v1956 = vmax.f32 %v1948, 0.0
        %v1957 = vmax.f32 %v1949, 0.0
        %v1958 = vpack.c.bf16 %v1950, %v1950
        %v1959 = vpack.c.bf16 %v1951, %v1951
        %v1960 = vpack.c.bf16 %v1952, %v1952
        %v1961 = vpack.c.bf16 %v1953, %v1953
        %v1962 = vpack.c.bf16 %v1954, %v1954
        %v1963 = vpack.c.bf16 %v1955, %v1955
        %v1964 = vpack.c.bf16 %v1956, %v1956
        %v1965 = vpack.c.bf16 %v1957, %v1957
        %1966 = vst [vmem:[%s527] sm:$0xf] %v1958
        %1967 = vst [vmem:[%s527 + $0x4] sm:$0xf] %v1959
        %1968 = vst [vmem:[%s527 + $0x8] sm:$0xf] %v1960
        %1969 = vst [vmem:[%s527 + $0xc] sm:$0xf] %v1961
        %1970 = vst [vmem:[%s527 + $0x10] sm:$0xf] %v1962
        %1971 = vst [vmem:[%s527 + $0x14] sm:$0xf] %v1963
        %1972 = vst [vmem:[%s527 + $0x18] sm:$0xf] %v1964
        %1973 = vst [vmem:[%s527 + $0x1c] sm:$0xf] %v1965
        %s1974 = sand.u32 %s279, 1
        %s1975 = scalar_lea.sflag [#allocation4], %s1974
        %s1976 = sand.u32 %s279, 1
        %s1977 = smul.addr %s1976, 32
        %s1978 = scalar_lea.vmem [#allocation13], %s1977
        // Predicated region
        $region81: #{tpu_custom_call.1} parent=55 // pred_check
          %p1979 = pneg %p289
        $region82: #{tpu_custom_call.1} parent=55 // pred_check_branch
          %1981 = sbr.rel (%p1979) target = $region84
        $region83: #{tpu_custom_call.1} parent=55 // pred_region
          %s1982 = smul.u32 8, %s36
          %1984 = vsyncadd %s1975, 0
          %s1985 = smul.addr %s35, 8
          %s1986 = sadd.s32 %s1982, %s1985
          %s1987 = smul.addr %s1986, 4
          %s1988 = scalar_lea.hbm %s9, %s1987
          %s1989 = sshll.u32 %s1978, 4
          %s1990 = int_to_ptr.vmem [resolvable:$true] %s1989
          %s1991 = sshll.u32 %s1988, 4
          %s1992 = int_to_ptr.hbm [resolvable:$true] %s1991
          %1997 = dma.vmem_to_hbm [thread:$0]  %s1990, 512, %s1992, %s1975, 64, 64, 4
        $region84: #{tpu_custom_call.1} parent=55 // pred_fallthru
          _
      $region56: #{tpu_custom_call.1} parent=5 // pred_fallthru
        _
      %p1998 = scmp.le.s32.totalorder 2, %s26
      // Predicated region
      $region85: #{tpu_custom_call.1} parent=5 // pred_check
        %p1999 = pneg %p1998
      $region86: #{tpu_custom_call.1} parent=5 // pred_check_branch
        %2001 = sbr.rel (%p1999) target = $region88
      $region87: #{tpu_custom_call.1} parent=5 // pred_region
        %s2002 = ssub.s32 %s26, 2
        // Predicated region
        $region89: #{tpu_custom_call.1} parent=87 // pred_check
          %p2003 = pneg %p295
        $region90: #{tpu_custom_call.1} parent=87 // pred_check_branch
          %2005 = sbr.rel (%p2003) target = $region92
        $region91: #{tpu_custom_call.1} parent=87 // pred_region
          %s2006 = sand.u32 %s280, 1
          %s2007 = scalar_lea.sflag [#allocation4], %s2006
          %s2008 = sand.u32 %s280, 1
          %s2009 = smul.addr %s2008, 32
          %s2010 = scalar_lea.vmem [#allocation13], %s2009
          %2012 = dma.done %s2007, 512
        $region92: #{tpu_custom_call.1} parent=87 // pred_fallthru
          _
      $region88: #{tpu_custom_call.1} parent=5 // pred_fallthru
        _
    $region6: #{tpu_custom_call.1} parent=1 // loop_footer
      %s30 = sadd.s32 1, %s26
    $region7: #{tpu_custom_call.1} parent=1 // loop_footer_branch
      %25 = sbr.rel target = $region3
    $region8: #{tpu_custom_call.1} parent=1 // loop_exit
      _
    %2013 = vsyncpa [#allocation3], 1
    %s2014 = scalar_lea.sflag [#allocation3], 1
    %2015 = vsyncpa %s2014, 1
    %2016 = vsyncpa [#allocation6], 1
    %s2017 = scalar_lea.sflag [#allocation6], 1
    %2018 = vsyncpa %s2017, 1
    %2019 = vsyncpa [#allocation9], 1
    %2020 = vsyncpa [#allocation12], 1
    %2021 = vsyncpa [#allocation4], 1
    %s2022 = scalar_lea.sflag [#allocation4], 1
    %2023 = vsyncpa %s2022, 1

</llo_original>
